<compile_context>
chip_gen: v7x
topology: tpu7x:2x2x1
jax: 0.10.0
libtpu: 0.0.40
codegen_flags: <defaults>
</compile_context>

<pallas_src>
import math

import jax
import jax.numpy as jnp
import numpy as np
from jax.experimental import pallas as pl
from jax.experimental.pallas import tpu as pltpu

# -------------------- deterministic config (stands in for waveform_sim.yaml) --------------------
CFG = {
    "NOMINAL_SINGLET_FRACTION": 0.3,   "SINGLET_FRACTION": 0.25,
    "NOMINAL_TAU_S": 0.001,            "TAU_S": 0.0012,          # microseconds
    "NOMINAL_TAU_T": 1.53,             "TAU_T": 1.6,
    "NOMINAL_LIGHT_OSCILLATION_PERIOD": 0.095, "LIGHT_OSCILLATION_PERIOD": 0.11,
    "NOMINAL_LIGHT_RESPONSE_TIME": 0.055,      "LIGHT_RESPONSE_TIME": 0.05,
    "NOMINAL_LIGHT_GAIN": 0.02,        "LIGHT_GAIN": 0.025,
    "LIGHT_TICK_SIZE": 0.001,          # 1 ns per light tick
    "LIGHT_WINDOW": (0.0, 0.064),      # -> conv_ticks = 64
}

LIGHT_TICK_SIZE = CFG["LIGHT_TICK_SIZE"]
CONV_TICKS = math.ceil((CFG["LIGHT_WINDOW"][1] - CFG["LIGHT_WINDOW"][0]) / LIGHT_TICK_SIZE)
K_RELAX = 100.0          # self.k in the torch module
NS_PER_TICK = 16         # downsample factor
TN = 128                 # output-column tile (downsampled ticks) -> lane-dense output


def _logit(x):
    return math.log(x / (1.0 - x))


# Parameters stored the torch way: value / nominal.
NOMINAL = {
    "singlet_fraction_logit": _logit(CFG["NOMINAL_SINGLET_FRACTION"]),
    "log_tau_s": math.log10(CFG["NOMINAL_TAU_S"]),
    "log_tau_t": math.log10(CFG["NOMINAL_TAU_T"]),
    "log_light_oscillation_period": math.log10(CFG["NOMINAL_LIGHT_OSCILLATION_PERIOD"]),
    "log_light_response_time": math.log10(CFG["NOMINAL_LIGHT_RESPONSE_TIME"]),
    "light_gain": CFG["NOMINAL_LIGHT_GAIN"],
}
CURRENT = {
    "singlet_fraction_logit": _logit(CFG["SINGLET_FRACTION"]),
    "log_tau_s": math.log10(CFG["TAU_S"]),
    "log_tau_t": math.log10(CFG["TAU_T"]),
    "log_light_oscillation_period": math.log10(CFG["LIGHT_OSCILLATION_PERIOD"]),
    "log_light_response_time": math.log10(CFG["LIGHT_RESPONSE_TIME"]),
    "light_gain": CFG["LIGHT_GAIN"],
}
PARAMS = {k: jnp.asarray(CURRENT[k] / NOMINAL[k], dtype=jnp.float32) for k in NOMINAL}


# -------------------- kernel-tap generation (tiny length-64 vectors, plain JAX) ------------------
def scintillation_model(time_tick):
    sf = jax.nn.sigmoid(PARAMS["singlet_fraction_logit"] * NOMINAL["singlet_fraction_logit"])
    tau_s = jnp.power(10.0, PARAMS["log_tau_s"] * NOMINAL["log_tau_s"])
    tau_t = jnp.power(10.0, PARAMS["log_tau_t"] * NOMINAL["log_tau_t"])
    t = time_tick * LIGHT_TICK_SIZE
    p1 = sf * jnp.exp(-t / tau_s) * (1.0 - jnp.exp(-LIGHT_TICK_SIZE / tau_s))
    p3 = (1.0 - sf) * jnp.exp(-t / tau_t) * (1.0 - jnp.exp(-LIGHT_TICK_SIZE / tau_t))
    return (p1 + p3) / (1.0 + jnp.exp(-K_RELAX * t))      # relax_cut=True


def sipm_response_model(time_tick):
    t = time_tick * LIGHT_TICK_SIZE
    period = jnp.power(10.0, PARAMS["log_light_oscillation_period"]
                       * NOMINAL["log_light_oscillation_period"])
    rtime = jnp.power(10.0, PARAMS["log_light_response_time"]
                      * NOMINAL["log_light_response_time"])
    impulse = jnp.exp(-t / rtime) * jnp.sin(t / period)
    # relax_cut=True: torch divides by (1 + exp(-k * time_tick)) using the tick index.
    impulse = impulse / (1.0 + jnp.exp(-K_RELAX * time_tick))
    impulse = impulse / (period * rtime ** 2)
    impulse = impulse * (period ** 2 + rtime ** 2)
    return impulse * LIGHT_TICK_SIZE


# -------------------- banded fused operator (conv1 * conv2 * gain * pool-16) ---------------------
def _build_banded_operators(pad):
    """Per-column-tile weight blocks of the fused forward operator.

    out[r, j] = sum_p x[r, p] * F[16*j - p] with F supported on d in [-15, K2-1], so for a
    TN-wide column tile the only x needed is a (16*TN + pad)-wide window whose weights are
    independent of the tile index.  Returns Wmain (16*TN, TN) and Wtail (pad, TN), bf16.
    """
    K = CONV_TICKS
    K2 = 2 * K - 1
    t = jnp.arange(K, dtype=jnp.float32)
    k1 = scintillation_model(t).astype(jnp.float32)
    k2 = sipm_response_model(t).astype(jnp.float32)
    k12 = jnp.convolve(k1, k2).astype(jnp.float32)         # (K2,) fused conv kernel (exact)
    gain = (PARAMS["light_gain"] * NOMINAL["light_gain"]).astype(jnp.float32)

    # F[d] = gain * sum_{m<16} k12[d + m], support d in [-15, K2 - 1].
    d_min, d_max = -(NS_PER_TICK - 1), K2 - 1
    d = jnp.arange(d_min, d_max + 1)
    idx = d[:, None] + jnp.arange(NS_PER_TICK)[None, :]
    band = jnp.where((idx >= 0) & (idx < K2), k12[jnp.clip(idx, 0, K2 - 1)], 0.0)
    F = gain * band.sum(-1)                                 # indexed by d - d_min

    def F_at(darr):
        ok = (darr >= d_min) & (darr <= d_max)
        return jnp.where(ok, F[jnp.clip(darr - d_min, 0, F.shape[0] - 1)], 0.0)

    jj = jnp.arange(TN)
    qm = jnp.arange(NS_PER_TICK * TN)                       # offsets inside the main window
    qt = jnp.arange(pad)                                    # offsets inside the tail window
    w_main = F_at(NS_PER_TICK * jj[None, :] - qm[:, None] + pad)
    w_tail = F_at(NS_PER_TICK * jj[None, :] - qt[:, None] - (NS_PER_TICK * TN - pad))
    # TODO(synk): an fp8 variant of w_main/w_tail for v7x (review suggestion) is left out
    # pending accuracy validation; bf16 already keeps the error well inside tolerance.
    return w_main.astype(jnp.bfloat16), w_tail.astype(jnp.bfloat16)


# -------------------- Pallas kernel: one output tile = two MXU matmuls ---------------------------
def _banded_conv_pool_kernel(xa_ref, xb_ref, wm_ref, wt_ref, out_ref):
    # Full fused forward for (TR rows) x (TN downsampled ticks): aligned main-window matmul
    # plus a small tail matmul; f32 accumulation, result written straight to the f32 output.
    out_ref[...] = (
        jnp.dot(xa_ref[...], wm_ref[...], preferred_element_type=jnp.float32)
        + jnp.dot(xb_ref[...], wt_ref[...], preferred_element_type=jnp.float32)
    )


def _round_up(x, m):
    return ((x + m - 1) // m) * m


def batched_light_simulation(timing_dist):
    """JAX/Pallas equivalent of BatchedLightSimulation.forward(timing_dist, relax_cut=True)."""
    reshaped = False
    if timing_dist.ndim == 1:
        timing_dist = timing_dist[None, None, :]
        reshaped = True
    elif timing_dist.ndim == 2:
        timing_dist = timing_dist[None, :, :]
        reshaped = True

    ninput, ndet, ntick = timing_dist.shape
    assert ntick % NS_PER_TICK == 0, "ntick must be a multiple of 16 (as in the torch module)"
    n_rows = ninput * ndet
    ndown = ntick // NS_PER_TICK

    # Left-pad / tail length: must cover the K2-1 causal look-back; multiple of 128 for alignment.
    pad = _round_up(2 * CONV_TICKS - 2, 128)                # 126 -> 128
    wa = NS_PER_TICK * TN                                   # main-window width per column tile
    w_main, w_tail = _build_banded_operators(pad)

    # ----- tiling -----
    ndown_p = _round_up(ndown, TN)
    n_col_tiles = ndown_p // TN
    TR = min(256, _round_up(n_rows, 16))                    # multiple of 16 for bf16 packing
    rows_p = _round_up(n_rows, TR)
    n_row_tiles = rows_p // TR

    # ----- operands (bf16 inputs, f32 accumulation in the kernel) -----
    x = timing_dist.reshape(n_rows, ntick).astype(jnp.bfloat16)
    width = NS_PER_TICK * ndown_p + 2 * pad                 # left pad + data(+col pad) + tail room
    xpad = jnp.pad(x, ((0, rows_p - n_rows), (pad, width - pad - ntick)))

    # ----- explicit VMEM budget: double-buffered blocks + slack (fits v5e/v6e/v7x easily) -----
    block_bytes = (TR * wa * 2 + TR * pad * 2 + wa * TN * 2 + pad * TN * 2 + TR * TN * 4)
    vmem_limit = int(max(2 * block_bytes + (4 << 20), 16 << 20))

    grid_spec = pltpu.PrefetchScalarGridSpec(
        num_scalar_prefetch=0,
        grid=(n_row_tiles, n_col_tiles),
        in_specs=[
            # main x window: time columns [wa*j, wa*(j+1))
            pl.BlockSpec((TR, wa), lambda i, j: (i, j)),
            # tail x window: time columns [wa*(j+1), wa*(j+1) + pad)    (wa % pad == 0)
            pl.BlockSpec((TR, pad), lambda i, j: (i, (j + 1) * (wa // pad))),
            # weight blocks: constant index -> DMA'd once, VMEM-resident for the whole run
            pl.BlockSpec((wa, TN), lambda i, j: (0, 0)),
            pl.BlockSpec((pad, TN), lambda i, j: (0, 0)),
        ],
        out_specs=pl.BlockSpec((TR, TN), lambda i, j: (i, j)),
    )

    out = pl.pallas_call(
        _banded_conv_pool_kernel,
        out_shape=jax.ShapeDtypeStruct((rows_p, ndown_p), jnp.float32),
        grid_spec=grid_spec,
        compiler_params=pltpu.CompilerParams(
            dimension_semantics=("parallel", "parallel"),
            vmem_limit_bytes=vmem_limit),
    )(xpad, xpad, w_main, w_tail)

    out = out[:n_rows, :ndown].reshape(ninput, ndet, ndown)
    if reshaped:                                            # mimic torch .squeeze(0).squeeze(0)
        if out.shape[0] == 1:
            out = out[0]
        if out.ndim >= 1 and out.shape[0] == 1:
            out = out[0]
    return out


# -------------------- pure-JAX reference (independent correctness check) -------------------------
def reference_forward(timing_dist):
    ninput, ndet, ntick = timing_dist.shape
    time_ticks = jnp.arange(CONV_TICKS, dtype=jnp.float32)
    k1 = scintillation_model(time_ticks)
    k2 = sipm_response_model(time_ticks)
    gain = PARAMS["light_gain"] * NOMINAL["light_gain"]
    x = timing_dist.reshape(-1, ntick).astype(jnp.float32)

    y = jax.vmap(lambda r: jnp.convolve(r, k1)[:ntick])(x)
    z = jax.vmap(lambda r: jnp.convolve(r, k2)[:ntick])(y)
    z = z * gain
    return z.reshape(ninput, ndet, ntick // NS_PER_TICK, NS_PER_TICK).sum(-1)


if __name__ == "__main__":
    key = jax.random.PRNGKey(0)
    key_a, key_b = jax.random.split(key)

    # Case 1: 3-D input, single row/column tile (ntick//16 = 16 -> padded to one 128-wide tile).
    ninput, ndet, ntick = 2, 4, 256
    x_small = jax.random.uniform(key_a, (ninput, ndet, ntick), dtype=jnp.float32)
    out_small = jax.block_until_ready(batched_light_simulation(x_small))
    assert out_small.shape == (ninput, ndet, ntick // NS_PER_TICK)
    ref_small = jax.block_until_ready(reference_forward(x_small))
    # bf16 operands with f32 accumulation over a ~142-tap band: error well below 1%.
    np.testing.assert_allclose(np.asarray(out_small), np.asarray(ref_small),
                               rtol=1e-2, atol=2e-5)

    # Case 2: 2-D input, two column tiles (exercises the banded window offsets + row padding).
    ndet2, ntick2 = 3, 4096
    x_med = jax.random.uniform(key_b, (ndet2, ntick2), dtype=jnp.float32)
    out_med = jax.block_until_ready(batched_light_simulation(x_med))
    assert out_med.shape == (ndet2, ntick2 // NS_PER_TICK)
    ref_med = jax.block_until_ready(reference_forward(x_med[None]))[0]
    np.testing.assert_allclose(np.asarray(out_med), np.asarray(ref_med),
                               rtol=1e-2, atol=2e-5)

    print("KERNEL_OK")
</pallas_src>

<mosaic_0001>
module attributes {stable_mosaic.version = 11 : i64} {
  func.func @_banded_conv_pool_kernel(%arg0: i32, %arg1: i32, %arg2: memref<16x2048xbf16, #tpu.memory_space<vmem>>, %arg3: memref<16x128xbf16, #tpu.memory_space<vmem>>, %arg4: memref<2048x128xbf16, #tpu.memory_space<vmem>>, %arg5: memref<128x128xbf16, #tpu.memory_space<vmem>>, %arg6: memref<16x128xf32, #tpu.memory_space<vmem>>) attributes {dimension_semantics = [#tpu.dimension_semantics<parallel>, #tpu.dimension_semantics<parallel>], iteration_bounds = array<i64: 1, 1>, scalar_prefetch = 0 : i64, scratch_operands = 0 : i64, tpu.core_type = #tpu.core_type<tc>, window_params = [{transform_indices = @transform_0, window_bounds = array<i64: 16, 2048>}, {transform_indices = @transform_1, window_bounds = array<i64: 16, 128>}, {pipeline_mode = #tpu.pipeline_mode<synchronous>, transform_indices = @transform_2, window_bounds = array<i64: 2048, 128>}, {pipeline_mode = #tpu.pipeline_mode<synchronous>, transform_indices = @transform_3, window_bounds = array<i64: 128, 128>}, {transform_indices = @transform_4, window_bounds = array<i64: 16, 128>}]} {
    %c0 = arith.constant 0 : index
    %c0_0 = arith.constant 0 : index
    %0 = vector.load %arg2[%c0, %c0_0] : memref<16x2048xbf16, #tpu.memory_space<vmem>>, vector<16x2048xbf16>
    %c0_1 = arith.constant 0 : index
    %c0_2 = arith.constant 0 : index
    %1 = vector.load %arg4[%c0_1, %c0_2] : memref<2048x128xbf16, #tpu.memory_space<vmem>>, vector<2048x128xbf16>
    %cst = arith.constant dense<0.000000e+00> : vector<16x128xf32>
    %2 = tpu.matmul %0, %1, %cst {dimension_numbers = #tpu.dot_dimension_numbers<[1], [0], [0], [1], [0, 0, 1, 1], [], []>} : vector<16x2048xbf16>, vector<2048x128xbf16>, vector<16x128xf32> -> vector<16x128xf32>
    %c0_3 = arith.constant 0 : index
    %c0_4 = arith.constant 0 : index
    %3 = vector.load %arg3[%c0_3, %c0_4] : memref<16x128xbf16, #tpu.memory_space<vmem>>, vector<16x128xbf16>
    %c0_5 = arith.constant 0 : index
    %c0_6 = arith.constant 0 : index
    %4 = vector.load %arg5[%c0_5, %c0_6] : memref<128x128xbf16, #tpu.memory_space<vmem>>, vector<128x128xbf16>
    %cst_7 = arith.constant dense<0.000000e+00> : vector<16x128xf32>
    %5 = tpu.matmul %3, %4, %cst_7 {dimension_numbers = #tpu.dot_dimension_numbers<[1], [0], [0], [1], [0, 0, 1, 1], [], []>} : vector<16x128xbf16>, vector<128x128xbf16>, vector<16x128xf32> -> vector<16x128xf32>
    %6 = arith.addf %2, %5 : vector<16x128xf32>
    %c0_8 = arith.constant 0 : index
    %c0_9 = arith.constant 0 : index
    %7 = vector.load %arg6[%c0_8, %c0_9] : memref<16x128xf32, #tpu.memory_space<vmem>>, vector<16x128xf32>
    tpu.vector_store %arg6[%c0_8, %c0_9], %6 {strides = array<i32>} : memref<16x128xf32, #tpu.memory_space<vmem>>, vector<16x128xf32>,
    return
  }
  func.func @transform_0(%arg0: i32, %arg1: i32) -> (i32, i32) {
    %c0_i32 = arith.constant 0 : i32
    return %arg0, %arg1 : i32, i32
  }
  func.func @transform_1(%arg0: i32, %arg1: i32) -> (i32, i32) {
    %c1_i32 = arith.constant 1 : i32
    %0 = arith.addi %arg1, %c1_i32 : i32
    %c16_i32 = arith.constant 16 : i32
    %1 = arith.muli %0, %c16_i32 : i32
    %c0_i32 = arith.constant 0 : i32
    return %arg0, %1 : i32, i32
  }
  func.func @transform_2(%arg0: i32, %arg1: i32) -> (i32, i32) {
    %c0_i32 = arith.constant 0 : i32
    %c0_i32_0 = arith.constant 0 : i32
    %c0_i32_1 = arith.constant 0 : i32
    return %c0_i32, %c0_i32_0 : i32, i32
  }
  func.func @transform_3(%arg0: i32, %arg1: i32) -> (i32, i32) {
    %c0_i32 = arith.constant 0 : i32
    %c0_i32_0 = arith.constant 0 : i32
    %c0_i32_1 = arith.constant 0 : i32
    return %c0_i32, %c0_i32_0 : i32, i32
  }
  func.func @transform_4(%arg0: i32, %arg1: i32) -> (i32, i32) {
    %c0_i32 = arith.constant 0 : i32
    return %arg0, %arg1 : i32, i32
  }
}

</mosaic_0001>

<llo_original>
// kernel: tpu_custom_call.1
$region0: #{tpu_custom_call.1}
  #allocation0 [shape = 'u32[]', space=smem, size = 0x4, offset = 0x4, fixed_abs, tag = 'smem constant byte address 0x4 - core index']
  #allocation1 [shape = 'u32[144,128]{1,0:T(1,128)}', space=vmem, size = 0x12000, scoped, tag = 'internal scratch']
  %s0 = inlined_call_operand.hbm [shape: bf16[16,2304], index: 0, kind: input, shape index: {}]
  %s1 = inlined_call_operand.hbm [shape: bf16[16,2304], index: 1, kind: input, shape index: {}]
  %s2 = inlined_call_operand.hbm [shape: bf16[2048,128], index: 2, kind: input, shape index: {}]
  %s3 = inlined_call_operand.hbm [shape: bf16[128,128], index: 3, kind: input, shape index: {}]
  %s4 = inlined_call_operand.hbm [shape: f32[16,128], index: 4, kind: output, shape index: {}]
  %s5 = sld [smem:[#allocation0]]
  $region42: #{tpu_custom_call.1} parent=0
    _
  %s7 = ssub.s32 1, %s5
  %s8 = scalar_select 0, %s7, %s5
  $region1: #{tpu_custom_call.1} parent=0
    #allocation2 [shape = 'u8[65536]{0}', space=vmem, size = 0x10000, scoped, tag = 'input window, operand 0, single buffered']
    #allocation3 [shape = 's32[1]{0}', space=sflag, size = 0x4, scoped, tag = 'scoped memory for tpu_custom_call.1']
    #allocation4 [shape = 's32[1]{0}', space=sflag, size = 0x4, scoped, tag = 'scoped memory for tpu_custom_call.1']
    #allocation5 [shape = 'u8[4096]{0}', space=vmem, size = 0x1000, scoped, tag = 'input window, operand 1, single buffered']
    #allocation6 [shape = 's32[1]{0}', space=sflag, size = 0x4, scoped, tag = 'scoped memory for tpu_custom_call.1']
    #allocation7 [shape = 'u8[524288]{0}', space=vmem, size = 0x80000, scoped, tag = 'input window, operand 2, single buffered']
    #allocation8 [shape = 'u8[32768]{0}', space=vmem, size = 0x8000, scoped, tag = 'input window, operand 3, single buffered']
    #allocation9 [shape = 's32[1]{0}', space=sflag, size = 0x4, scoped, tag = 'scoped memory for tpu_custom_call.1']
    #allocation10 [shape = 'u8[8192]{0}', space=vmem, size = 0x2000, scoped, tag = 'output window, operand 0, single buffered']
    %9 = vsyncpa [#allocation3], 0
    %10 = vsyncpa [#allocation6], 0
    %11 = vsyncpa [#allocation9], 0
    %12 = vsyncpa [#allocation4], 0
    // Predicated region
    $region2: #{tpu_custom_call.1} parent=1 // pred_check
      _
    $region3: #{tpu_custom_call.1} parent=1 // pred_check_branch
      %14 = sbr.rel (0) target = $region5
    $region4: #{tpu_custom_call.1} parent=1 // pred_region
      %s16 = ssub.s32 2048, 2048
      %17 = vsyncadd [#allocation3], %s16
      %s18 = sshll.u32 [#allocation2], 4
      %s19 = int_to_ptr.vmem [resolvable:$true] %s18
      %24 = dma.hbm_to_vmem [thread:$0]  %s0, 2048, %s19, [#allocation3], 1152, 1024, 64
    $region5: #{tpu_custom_call.1} parent=1 // pred_fallthru
      _
    // Predicated region
    $region6: #{tpu_custom_call.1} parent=1 // pred_check
      _
    $region7: #{tpu_custom_call.1} parent=1 // pred_check_branch
      %26 = sbr.rel (0) target = $region9
    $region8: #{tpu_custom_call.1} parent=1 // pred_region
      %s27 = sadd.s32 0, 1
      %s28 = smul.u32 %s27, 16
      %s30 = ssub.s32 128, 128
      %31 = vsyncadd [#allocation6], %s30
      %s32 = smul.addr %s28, 64
      %s33 = scalar_lea.hbm %s1, %s32
      %s34 = sshll.u32 [#allocation5], 4
      %s35 = int_to_ptr.vmem [resolvable:$true] %s34
      %40 = dma.hbm_to_vmem [thread:$0]  %s33, 128, %s35, [#allocation6], 1152, 64, 4
    $region9: #{tpu_custom_call.1} parent=1 // pred_fallthru
      _
    // Predicated region
    $region10: #{tpu_custom_call.1} parent=1 // pred_check
      _
    $region11: #{tpu_custom_call.1} parent=1 // pred_check_branch
      %42 = sbr.rel (0) target = $region13
    $region12: #{tpu_custom_call.1} parent=1 // pred_region
      %s44 = ssub.s32 16384, 16384
      %45 = vsyncadd [#allocation6], %s44
      %s46 = sshll.u32 [#allocation7], 4
      %s47 = int_to_ptr.vmem [resolvable:$true] %s46
      %52 = dma.hbm_to_vmem [thread:$0]  %s2, 16384, %s47, [#allocation6], 64, 64, 4
    $region13: #{tpu_custom_call.1} parent=1 // pred_fallthru
      _
    // Predicated region
    $region14: #{tpu_custom_call.1} parent=1 // pred_check
      _
    $region15: #{tpu_custom_call.1} parent=1 // pred_check_branch
      %54 = sbr.rel (0) target = $region17
    $region16: #{tpu_custom_call.1} parent=1 // pred_region
      %s56 = ssub.s32 1024, 1024
      %57 = vsyncadd [#allocation9], %s56
      %s58 = sshll.u32 [#allocation8], 4
      %s59 = int_to_ptr.vmem [resolvable:$true] %s58
      %64 = dma.hbm_to_vmem [thread:$0]  %s3, 1024, %s59, [#allocation9], 64, 64, 4
    $region17: #{tpu_custom_call.1} parent=1 // pred_fallthru
      _
    // Predicated region
    $region18: #{tpu_custom_call.1} parent=1 // pred_check
      _
    $region19: #{tpu_custom_call.1} parent=1 // pred_check_branch
      %66 = sbr.rel (0) target = $region21
    $region20: #{tpu_custom_call.1} parent=1 // pred_region
      %67 = dma.done [#allocation3], 2048
    $region21: #{tpu_custom_call.1} parent=1 // pred_fallthru
      _
    // Predicated region
    $region22: #{tpu_custom_call.1} parent=1 // pred_check
      _
    $region23: #{tpu_custom_call.1} parent=1 // pred_check_branch
      %69 = sbr.rel (0) target = $region25
    $region24: #{tpu_custom_call.1} parent=1 // pred_region
      %70 = dma.done [#allocation6], 128
    $region25: #{tpu_custom_call.1} parent=1 // pred_fallthru
      _
    // Predicated region
    $region26: #{tpu_custom_call.1} parent=1 // pred_check
      _
    $region27: #{tpu_custom_call.1} parent=1 // pred_check_branch
      %72 = sbr.rel (0) target = $region29
    $region28: #{tpu_custom_call.1} parent=1 // pred_region
      %73 = dma.done [#allocation6], 16384
    $region29: #{tpu_custom_call.1} parent=1 // pred_fallthru
      _
    // Predicated region
    $region30: #{tpu_custom_call.1} parent=1 // pred_check
      _
    $region31: #{tpu_custom_call.1} parent=1 // pred_check_branch
      %75 = sbr.rel (0) target = $region33
    $region32: #{tpu_custom_call.1} parent=1 // pred_region
      %76 = dma.done [#allocation9], 1024
    $region33: #{tpu_custom_call.1} parent=1 // pred_fallthru
      _
    %s77 = sadd.s32 0, 1
    %s78 = smul.u32 %s77, 16
    %v80 = vld [vmem:[#allocation2] sm:$0xff]
    %v81 = vld [vmem:[#allocation2 + $0x8] sm:$0xff]
    %v82 = vld [vmem:[#allocation2 + $0x10] sm:$0xff]
    %v83 = vld [vmem:[#allocation2 + $0x18] sm:$0xff]
    %v84 = vld [vmem:[#allocation2 + $0x20] sm:$0xff]
    %v85 = vld [vmem:[#allocation2 + $0x28] sm:$0xff]
    %v86 = vld [vmem:[#allocation2 + $0x30] sm:$0xff]
    %v87 = vld [vmem:[#allocation2 + $0x38] sm:$0xff]
    %v88 = vld [vmem:[#allocation2 + $0x40] sm:$0xff]
    %v89 = vld [vmem:[#allocation2 + $0x48] sm:$0xff]
    %v90 = vld [vmem:[#allocation2 + $0x50] sm:$0xff]
    %v91 = vld [vmem:[#allocation2 + $0x58] sm:$0xff]
    %v92 = vld [vmem:[#allocation2 + $0x60] sm:$0xff]
    %v93 = vld [vmem:[#allocation2 + $0x68] sm:$0xff]
    %v94 = vld [vmem:[#allocation2 + $0x70] sm:$0xff]
    %v95 = vld [vmem:[#allocation2 + $0x78] sm:$0xff]
    %v96 = vld [vmem:[#allocation7] sm:$0xf]
    %v97 = vld [vmem:[#allocation7 + $0x4] sm:$0xf]
    %v98 = vld [vmem:[#allocation7 + $0x8] sm:$0xf]
    %v99 = vld [vmem:[#allocation7 + $0xc] sm:$0xf]
    %v100 = vld [vmem:[#allocation7 + $0x10] sm:$0xf]
    %v101 = vld [vmem:[#allocation7 + $0x14] sm:$0xf]
    %v102 = vld [vmem:[#allocation7 + $0x18] sm:$0xf]
    %v103 = vld [vmem:[#allocation7 + $0x1c] sm:$0xf]
    %v104 = vld [vmem:[#allocation7 + $0x20] sm:$0xf]
    %v105 = vld [vmem:[#allocation7 + $0x24] sm:$0xf]
    %v106 = vld [vmem:[#allocation7 + $0x28] sm:$0xf]
    %v107 = vld [vmem:[#allocation7 + $0x2c] sm:$0xf]
    %v108 = vld [vmem:[#allocation7 + $0x30] sm:$0xf]
    %v109 = vld [vmem:[#allocation7 + $0x34] sm:$0xf]
    %v110 = vld [vmem:[#allocation7 + $0x38] sm:$0xf]
    %v111 = vld [vmem:[#allocation7 + $0x3c] sm:$0xf]
    %v112 = vld [vmem:[#allocation7 + $0x40] sm:$0xf]
    %v113 = vld [vmem:[#allocation7 + $0x44] sm:$0xf]
    %v114 = vld [vmem:[#allocation7 + $0x48] sm:$0xf]
    %v115 = vld [vmem:[#allocation7 + $0x4c] sm:$0xf]
    %v116 = vld [vmem:[#allocation7 + $0x50] sm:$0xf]
    %v117 = vld [vmem:[#allocation7 + $0x54] sm:$0xf]
    %v118 = vld [vmem:[#allocation7 + $0x58] sm:$0xf]
    %v119 = vld [vmem:[#allocation7 + $0x5c] sm:$0xf]
    %v120 = vld [vmem:[#allocation7 + $0x60] sm:$0xf]
    %v121 = vld [vmem:[#allocation7 + $0x64] sm:$0xf]
    %v122 = vld [vmem:[#allocation7 + $0x68] sm:$0xf]
    %v123 = vld [vmem:[#allocation7 + $0x6c] sm:$0xf]
    %v124 = vld [vmem:[#allocation7 + $0x70] sm:$0xf]
    %v125 = vld [vmem:[#allocation7 + $0x74] sm:$0xf]
    %v126 = vld [vmem:[#allocation7 + $0x78] sm:$0xf]
    %v127 = vld [vmem:[#allocation7 + $0x7c] sm:$0xf]
    %v128 = vld [vmem:[#allocation7 + $0x80] sm:$0xf]
    %v129 = vld [vmem:[#allocation7 + $0x84] sm:$0xf]
    %v130 = vld [vmem:[#allocation7 + $0x88] sm:$0xf]
    %v131 = vld [vmem:[#allocation7 + $0x8c] sm:$0xf]
    %v132 = vld [vmem:[#allocation7 + $0x90] sm:$0xf]
    %v133 = vld [vmem:[#allocation7 + $0x94] sm:$0xf]
    %v134 = vld [vmem:[#allocation7 + $0x98] sm:$0xf]
    %v135 = vld [vmem:[#allocation7 + $0x9c] sm:$0xf]
    %v136 = vld [vmem:[#allocation7 + $0xa0] sm:$0xf]
    %v137 = vld [vmem:[#allocation7 + $0xa4] sm:$0xf]
    %v138 = vld [vmem:[#allocation7 + $0xa8] sm:$0xf]
    %v139 = vld [vmem:[#allocation7 + $0xac] sm:$0xf]
    %v140 = vld [vmem:[#allocation7 + $0xb0] sm:$0xf]
    %v141 = vld [vmem:[#allocation7 + $0xb4] sm:$0xf]
    %v142 = vld [vmem:[#allocation7 + $0xb8] sm:$0xf]
    %v143 = vld [vmem:[#allocation7 + $0xbc] sm:$0xf]
    %v144 = vld [vmem:[#allocation7 + $0xc0] sm:$0xf]
    %v145 = vld [vmem:[#allocation7 + $0xc4] sm:$0xf]
    %v146 = vld [vmem:[#allocation7 + $0xc8] sm:$0xf]
    %v147 = vld [vmem:[#allocation7 + $0xcc] sm:$0xf]
    %v148 = vld [vmem:[#allocation7 + $0xd0] sm:$0xf]
    %v149 = vld [vmem:[#allocation7 + $0xd4] sm:$0xf]
    %v150 = vld [vmem:[#allocation7 + $0xd8] sm:$0xf]
    %v151 = vld [vmem:[#allocation7 + $0xdc] sm:$0xf]
    %v152 = vld [vmem:[#allocation7 + $0xe0] sm:$0xf]
    %v153 = vld [vmem:[#allocation7 + $0xe4] sm:$0xf]
    %v154 = vld [vmem:[#allocation7 + $0xe8] sm:$0xf]
    %v155 = vld [vmem:[#allocation7 + $0xec] sm:$0xf]
    %v156 = vld [vmem:[#allocation7 + $0xf0] sm:$0xf]
    %v157 = vld [vmem:[#allocation7 + $0xf4] sm:$0xf]
    %v158 = vld [vmem:[#allocation7 + $0xf8] sm:$0xf]
    %v159 = vld [vmem:[#allocation7 + $0xfc] sm:$0xf]
    %v160 = vld [vmem:[#allocation7 + $0x100] sm:$0xf]
    %v161 = vld [vmem:[#allocation7 + $0x104] sm:$0xf]
    %v162 = vld [vmem:[#allocation7 + $0x108] sm:$0xf]
    %v163 = vld [vmem:[#allocation7 + $0x10c] sm:$0xf]
    %v164 = vld [vmem:[#allocation7 + $0x110] sm:$0xf]
    %v165 = vld [vmem:[#allocation7 + $0x114] sm:$0xf]
    %v166 = vld [vmem:[#allocation7 + $0x118] sm:$0xf]
    %v167 = vld [vmem:[#allocation7 + $0x11c] sm:$0xf]
    %v168 = vld [vmem:[#allocation7 + $0x120] sm:$0xf]
    %v169 = vld [vmem:[#allocation7 + $0x124] sm:$0xf]
    %v170 = vld [vmem:[#allocation7 + $0x128] sm:$0xf]
    %v171 = vld [vmem:[#allocation7 + $0x12c] sm:$0xf]
    %v172 = vld [vmem:[#allocation7 + $0x130] sm:$0xf]
    %v173 = vld [vmem:[#allocation7 + $0x134] sm:$0xf]
    %v174 = vld [vmem:[#allocation7 + $0x138] sm:$0xf]
    %v175 = vld [vmem:[#allocation7 + $0x13c] sm:$0xf]
    %v176 = vld [vmem:[#allocation7 + $0x140] sm:$0xf]
    %v177 = vld [vmem:[#allocation7 + $0x144] sm:$0xf]
    %v178 = vld [vmem:[#allocation7 + $0x148] sm:$0xf]
    %v179 = vld [vmem:[#allocation7 + $0x14c] sm:$0xf]
    %v180 = vld [vmem:[#allocation7 + $0x150] sm:$0xf]
    %v181 = vld [vmem:[#allocation7 + $0x154] sm:$0xf]
    %v182 = vld [vmem:[#allocation7 + $0x158] sm:$0xf]
    %v183 = vld [vmem:[#allocation7 + $0x15c] sm:$0xf]
    %v184 = vld [vmem:[#allocation7 + $0x160] sm:$0xf]
    %v185 = vld [vmem:[#allocation7 + $0x164] sm:$0xf]
    %v186 = vld [vmem:[#allocation7 + $0x168] sm:$0xf]
    %v187 = vld [vmem:[#allocation7 + $0x16c] sm:$0xf]
    %v188 = vld [vmem:[#allocation7 + $0x170] sm:$0xf]
    %v189 = vld [vmem:[#allocation7 + $0x174] sm:$0xf]
    %v190 = vld [vmem:[#allocation7 + $0x178] sm:$0xf]
    %v191 = vld [vmem:[#allocation7 + $0x17c] sm:$0xf]
    %v192 = vld [vmem:[#allocation7 + $0x180] sm:$0xf]
    %v193 = vld [vmem:[#allocation7 + $0x184] sm:$0xf]
    %v194 = vld [vmem:[#allocation7 + $0x188] sm:$0xf]
    %v195 = vld [vmem:[#allocation7 + $0x18c] sm:$0xf]
    %v196 = vld [vmem:[#allocation7 + $0x190] sm:$0xf]
    %v197 = vld [vmem:[#allocation7 + $0x194] sm:$0xf]
    %v198 = vld [vmem:[#allocation7 + $0x198] sm:$0xf]
    %v199 = vld [vmem:[#allocation7 + $0x19c] sm:$0xf]
    %v200 = vld [vmem:[#allocation7 + $0x1a0] sm:$0xf]
    %v201 = vld [vmem:[#allocation7 + $0x1a4] sm:$0xf]
    %v202 = vld [vmem:[#allocation7 + $0x1a8] sm:$0xf]
    %v203 = vld [vmem:[#allocation7 + $0x1ac] sm:$0xf]
    %v204 = vld [vmem:[#allocation7 + $0x1b0] sm:$0xf]
    %v205 = vld [vmem:[#allocation7 + $0x1b4] sm:$0xf]
    %v206 = vld [vmem:[#allocation7 + $0x1b8] sm:$0xf]
    %v207 = vld [vmem:[#allocation7 + $0x1bc] sm:$0xf]
    %v208 = vld [vmem:[#allocation7 + $0x1c0] sm:$0xf]
    %v209 = vld [vmem:[#allocation7 + $0x1c4] sm:$0xf]
    %v210 = vld [vmem:[#allocation7 + $0x1c8] sm:$0xf]
    %v211 = vld [vmem:[#allocation7 + $0x1cc] sm:$0xf]
    %v212 = vld [vmem:[#allocation7 + $0x1d0] sm:$0xf]
    %v213 = vld [vmem:[#allocation7 + $0x1d4] sm:$0xf]
    %v214 = vld [vmem:[#allocation7 + $0x1d8] sm:$0xf]
    %v215 = vld [vmem:[#allocation7 + $0x1dc] sm:$0xf]
    %v216 = vld [vmem:[#allocation7 + $0x1e0] sm:$0xf]
    %v217 = vld [vmem:[#allocation7 + $0x1e4] sm:$0xf]
    %v218 = vld [vmem:[#allocation7 + $0x1e8] sm:$0xf]
    %v219 = vld [vmem:[#allocation7 + $0x1ec] sm:$0xf]
    %v220 = vld [vmem:[#allocation7 + $0x1f0] sm:$0xf]
    %v221 = vld [vmem:[#allocation7 + $0x1f4] sm:$0xf]
    %v222 = vld [vmem:[#allocation7 + $0x1f8] sm:$0xf]
    %v223 = vld [vmem:[#allocation7 + $0x1fc] sm:$0xf]
    %v224 = vld [vmem:[#allocation7 + $0x200] sm:$0xf]
    %v225 = vld [vmem:[#allocation7 + $0x204] sm:$0xf]
    %v226 = vld [vmem:[#allocation7 + $0x208] sm:$0xf]
    %v227 = vld [vmem:[#allocation7 + $0x20c] sm:$0xf]
    %v228 = vld [vmem:[#allocation7 + $0x210] sm:$0xf]
    %v229 = vld [vmem:[#allocation7 + $0x214] sm:$0xf]
    %v230 = vld [vmem:[#allocation7 + $0x218] sm:$0xf]
    %v231 = vld [vmem:[#allocation7 + $0x21c] sm:$0xf]
    %v232 = vld [vmem:[#allocation7 + $0x220] sm:$0xf]
    %v233 = vld [vmem:[#allocation7 + $0x224] sm:$0xf]
    %v234 = vld [vmem:[#allocation7 + $0x228] sm:$0xf]
    %v235 = vld [vmem:[#allocation7 + $0x22c] sm:$0xf]
    %v236 = vld [vmem:[#allocation7 + $0x230] sm:$0xf]
    %v237 = vld [vmem:[#allocation7 + $0x234] sm:$0xf]
    %v238 = vld [vmem:[#allocation7 + $0x238] sm:$0xf]
    %v239 = vld [vmem:[#allocation7 + $0x23c] sm:$0xf]
    %v240 = vld [vmem:[#allocation7 + $0x240] sm:$0xf]
    %v241 = vld [vmem:[#allocation7 + $0x244] sm:$0xf]
    %v242 = vld [vmem:[#allocation7 + $0x248] sm:$0xf]
    %v243 = vld [vmem:[#allocation7 + $0x24c] sm:$0xf]
    %v244 = vld [vmem:[#allocation7 + $0x250] sm:$0xf]
    %v245 = vld [vmem:[#allocation7 + $0x254] sm:$0xf]
    %v246 = vld [vmem:[#allocation7 + $0x258] sm:$0xf]
    %v247 = vld [vmem:[#allocation7 + $0x25c] sm:$0xf]
    %v248 = vld [vmem:[#allocation7 + $0x260] sm:$0xf]
    %v249 = vld [vmem:[#allocation7 + $0x264] sm:$0xf]
    %v250 = vld [vmem:[#allocation7 + $0x268] sm:$0xf]
    %v251 = vld [vmem:[#allocation7 + $0x26c] sm:$0xf]
    %v252 = vld [vmem:[#allocation7 + $0x270] sm:$0xf]
    %v253 = vld [vmem:[#allocation7 + $0x274] sm:$0xf]
    %v254 = vld [vmem:[#allocation7 + $0x278] sm:$0xf]
    %v255 = vld [vmem:[#allocation7 + $0x27c] sm:$0xf]
    %v256 = vld [vmem:[#allocation7 + $0x280] sm:$0xf]
    %v257 = vld [vmem:[#allocation7 + $0x284] sm:$0xf]
    %v258 = vld [vmem:[#allocation7 + $0x288] sm:$0xf]
    %v259 = vld [vmem:[#allocation7 + $0x28c] sm:$0xf]
    %v260 = vld [vmem:[#allocation7 + $0x290] sm:$0xf]
    %v261 = vld [vmem:[#allocation7 + $0x294] sm:$0xf]
    %v262 = vld [vmem:[#allocation7 + $0x298] sm:$0xf]
    %v263 = vld [vmem:[#allocation7 + $0x29c] sm:$0xf]
    %v264 = vld [vmem:[#allocation7 + $0x2a0] sm:$0xf]
    %v265 = vld [vmem:[#allocation7 + $0x2a4] sm:$0xf]
    %v266 = vld [vmem:[#allocation7 + $0x2a8] sm:$0xf]
    %v267 = vld [vmem:[#allocation7 + $0x2ac] sm:$0xf]
    %v268 = vld [vmem:[#allocation7 + $0x2b0] sm:$0xf]
    %v269 = vld [vmem:[#allocation7 + $0x2b4] sm:$0xf]
    %v270 = vld [vmem:[#allocation7 + $0x2b8] sm:$0xf]
    %v271 = vld [vmem:[#allocation7 + $0x2bc] sm:$0xf]
    %v272 = vld [vmem:[#allocation7 + $0x2c0] sm:$0xf]
    %v273 = vld [vmem:[#allocation7 + $0x2c4] sm:$0xf]
    %v274 = vld [vmem:[#allocation7 + $0x2c8] sm:$0xf]
    %v275 = vld [vmem:[#allocation7 + $0x2cc] sm:$0xf]
    %v276 = vld [vmem:[#allocation7 + $0x2d0] sm:$0xf]
    %v277 = vld [vmem:[#allocation7 + $0x2d4] sm:$0xf]
    %v278 = vld [vmem:[#allocation7 + $0x2d8] sm:$0xf]
    %v279 = vld [vmem:[#allocation7 + $0x2dc] sm:$0xf]
    %v280 = vld [vmem:[#allocation7 + $0x2e0] sm:$0xf]
    %v281 = vld [vmem:[#allocation7 + $0x2e4] sm:$0xf]
    %v282 = vld [vmem:[#allocation7 + $0x2e8] sm:$0xf]
    %v283 = vld [vmem:[#allocation7 + $0x2ec] sm:$0xf]
    %v284 = vld [vmem:[#allocation7 + $0x2f0] sm:$0xf]
    %v285 = vld [vmem:[#allocation7 + $0x2f4] sm:$0xf]
    %v286 = vld [vmem:[#allocation7 + $0x2f8] sm:$0xf]
    %v287 = vld [vmem:[#allocation7 + $0x2fc] sm:$0xf]
    %v288 = vld [vmem:[#allocation7 + $0x300] sm:$0xf]
    %v289 = vld [vmem:[#allocation7 + $0x304] sm:$0xf]
    %v290 = vld [vmem:[#allocation7 + $0x308] sm:$0xf]
    %v291 = vld [vmem:[#allocation7 + $0x30c] sm:$0xf]
    %v292 = vld [vmem:[#allocation7 + $0x310] sm:$0xf]
    %v293 = vld [vmem:[#allocation7 + $0x314] sm:$0xf]
    %v294 = vld [vmem:[#allocation7 + $0x318] sm:$0xf]
    %v295 = vld [vmem:[#allocation7 + $0x31c] sm:$0xf]
    %v296 = vld [vmem:[#allocation7 + $0x320] sm:$0xf]
    %v297 = vld [vmem:[#allocation7 + $0x324] sm:$0xf]
    %v298 = vld [vmem:[#allocation7 + $0x328] sm:$0xf]
    %v299 = vld [vmem:[#allocation7 + $0x32c] sm:$0xf]
    %v300 = vld [vmem:[#allocation7 + $0x330] sm:$0xf]
    %v301 = vld [vmem:[#allocation7 + $0x334] sm:$0xf]
    %v302 = vld [vmem:[#allocation7 + $0x338] sm:$0xf]
    %v303 = vld [vmem:[#allocation7 + $0x33c] sm:$0xf]
    %v304 = vld [vmem:[#allocation7 + $0x340] sm:$0xf]
    %v305 = vld [vmem:[#allocation7 + $0x344] sm:$0xf]
    %v306 = vld [vmem:[#allocation7 + $0x348] sm:$0xf]
    %v307 = vld [vmem:[#allocation7 + $0x34c] sm:$0xf]
    %v308 = vld [vmem:[#allocation7 + $0x350] sm:$0xf]
    %v309 = vld [vmem:[#allocation7 + $0x354] sm:$0xf]
    %v310 = vld [vmem:[#allocation7 + $0x358] sm:$0xf]
    %v311 = vld [vmem:[#allocation7 + $0x35c] sm:$0xf]
    %v312 = vld [vmem:[#allocation7 + $0x360] sm:$0xf]
    %v313 = vld [vmem:[#allocation7 + $0x364] sm:$0xf]
    %v314 = vld [vmem:[#allocation7 + $0x368] sm:$0xf]
    %v315 = vld [vmem:[#allocation7 + $0x36c] sm:$0xf]
    %v316 = vld [vmem:[#allocation7 + $0x370] sm:$0xf]
    %v317 = vld [vmem:[#allocation7 + $0x374] sm:$0xf]
    %v318 = vld [vmem:[#allocation7 + $0x378] sm:$0xf]
    %v319 = vld [vmem:[#allocation7 + $0x37c] sm:$0xf]
    %v320 = vld [vmem:[#allocation7 + $0x380] sm:$0xf]
    %v321 = vld [vmem:[#allocation7 + $0x384] sm:$0xf]
    %v322 = vld [vmem:[#allocation7 + $0x388] sm:$0xf]
    %v323 = vld [vmem:[#allocation7 + $0x38c] sm:$0xf]
    %v324 = vld [vmem:[#allocation7 + $0x390] sm:$0xf]
    %v325 = vld [vmem:[#allocation7 + $0x394] sm:$0xf]
    %v326 = vld [vmem:[#allocation7 + $0x398] sm:$0xf]
    %v327 = vld [vmem:[#allocation7 + $0x39c] sm:$0xf]
    %v328 = vld [vmem:[#allocation7 + $0x3a0] sm:$0xf]
    %v329 = vld [vmem:[#allocation7 + $0x3a4] sm:$0xf]
    %v330 = vld [vmem:[#allocation7 + $0x3a8] sm:$0xf]
    %v331 = vld [vmem:[#allocation7 + $0x3ac] sm:$0xf]
    %v332 = vld [vmem:[#allocation7 + $0x3b0] sm:$0xf]
    %v333 = vld [vmem:[#allocation7 + $0x3b4] sm:$0xf]
    %v334 = vld [vmem:[#allocation7 + $0x3b8] sm:$0xf]
    %v335 = vld [vmem:[#allocation7 + $0x3bc] sm:$0xf]
    %v336 = vld [vmem:[#allocation7 + $0x3c0] sm:$0xf]
    %v337 = vld [vmem:[#allocation7 + $0x3c4] sm:$0xf]
    %v338 = vld [vmem:[#allocation7 + $0x3c8] sm:$0xf]
    %v339 = vld [vmem:[#allocation7 + $0x3cc] sm:$0xf]
    %v340 = vld [vmem:[#allocation7 + $0x3d0] sm:$0xf]
    %v341 = vld [vmem:[#allocation7 + $0x3d4] sm:$0xf]
    %v342 = vld [vmem:[#allocation7 + $0x3d8] sm:$0xf]
    %v343 = vld [vmem:[#allocation7 + $0x3dc] sm:$0xf]
    %v344 = vld [vmem:[#allocation7 + $0x3e0] sm:$0xf]
    %v345 = vld [vmem:[#allocation7 + $0x3e4] sm:$0xf]
    %v346 = vld [vmem:[#allocation7 + $0x3e8] sm:$0xf]
    %v347 = vld [vmem:[#allocation7 + $0x3ec] sm:$0xf]
    %v348 = vld [vmem:[#allocation7 + $0x3f0] sm:$0xf]
    %v349 = vld [vmem:[#allocation7 + $0x3f4] sm:$0xf]
    %v350 = vld [vmem:[#allocation7 + $0x3f8] sm:$0xf]
    %v351 = vld [vmem:[#allocation7 + $0x3fc] sm:$0xf]
    %v352 = vld [vmem:[#allocation5] sm:$0xf]
    %v353 = vld [vmem:[#allocation5 + $0x4] sm:$0xf]
    %v354 = vld [vmem:[#allocation8] sm:$0xf]
    %v355 = vld [vmem:[#allocation8 + $0x4] sm:$0xf]
    %v356 = vld [vmem:[#allocation8 + $0x8] sm:$0xf]
    %v357 = vld [vmem:[#allocation8 + $0xc] sm:$0xf]
    %v358 = vld [vmem:[#allocation8 + $0x10] sm:$0xf]
    %v359 = vld [vmem:[#allocation8 + $0x14] sm:$0xf]
    %v360 = vld [vmem:[#allocation8 + $0x18] sm:$0xf]
    %v361 = vld [vmem:[#allocation8 + $0x1c] sm:$0xf]
    %v362 = vld [vmem:[#allocation8 + $0x20] sm:$0xf]
    %v363 = vld [vmem:[#allocation8 + $0x24] sm:$0xf]
    %v364 = vld [vmem:[#allocation8 + $0x28] sm:$0xf]
    %v365 = vld [vmem:[#allocation8 + $0x2c] sm:$0xf]
    %v366 = vld [vmem:[#allocation8 + $0x30] sm:$0xf]
    %v367 = vld [vmem:[#allocation8 + $0x34] sm:$0xf]
    %v368 = vld [vmem:[#allocation8 + $0x38] sm:$0xf]
    %v369 = vld [vmem:[#allocation8 + $0x3c] sm:$0xf]
    %v372 = vunpack.c.l.b16 %v352
    %v373 = vunpack.c.l.b16 %v353
    %v374 = vpack.c.b16 %v373, %v372
    %v392 = vunpack.c.l.b16 %v354
    %v393 = vunpack.c.l.b16 %v355
    %v394 = vunpack.c.l.b16 %v356
    %v395 = vunpack.c.l.b16 %v357
    %v396 = vunpack.c.l.b16 %v358
    %v397 = vunpack.c.l.b16 %v359
    %v398 = vunpack.c.l.b16 %v360
    %v399 = vunpack.c.l.b16 %v361
    %v400 = vunpack.c.l.b16 %v362
    %v401 = vunpack.c.l.b16 %v363
    %v402 = vunpack.c.l.b16 %v364
    %v403 = vunpack.c.l.b16 %v365
    %v404 = vunpack.c.l.b16 %v366
    %v405 = vunpack.c.l.b16 %v367
    %v406 = vunpack.c.l.b16 %v368
    %v407 = vunpack.c.l.b16 %v369
    %v408 = vpack.c.b16 %v393, %v392
    %v409 = vpack.c.b16 %v395, %v394
    %v410 = vpack.c.b16 %v397, %v396
    %v411 = vpack.c.b16 %v399, %v398
    %v412 = vpack.c.b16 %v401, %v400
    %v413 = vpack.c.b16 %v403, %v402
    %v414 = vpack.c.b16 %v405, %v404
    %v415 = vpack.c.b16 %v407, %v406
    %424 = vmatprep.subr.bf16.mxu0 0
    %425 = vmatpush1.bf16.msra.mxu0 %v408
    %426 = vmatprep.subr.bf16.mxu0 0
    %427 = vmatpush1.bf16.msra.mxu0 %v409
    %428 = vmatprep.subr.bf16.mxu0 0
    %429 = vmatpush1.bf16.msra.mxu0 %v410
    %430 = vmatprep.subr.bf16.mxu0 0
    %431 = vmatpush1.bf16.msra.mxu0 %v411
    %432 = vmatprep.subr.bf16.mxu0 0
    %433 = vmatpush1.bf16.msra.mxu0 %v412
    %434 = vmatprep.subr.bf16.mxu0 0
    %435 = vmatpush1.bf16.msra.mxu0 %v413
    %436 = vmatprep.subr.bf16.mxu0 0
    %437 = vmatpush1.bf16.msra.mxu0 %v414
    %438 = vmatprep.subr.bf16.mxu0 0
    %439 = vmatpush1.bf16.msra.mxu0 %v415
    %440 = vmatprep.subr.bf16.mxu0 0
    %441 = vmatpush1.bf16.msra.mxu0 0
    %442 = vmatprep.subr.bf16.mxu0 0
    %443 = vmatpush1.bf16.msra.mxu0 0
    %444 = vmatprep.subr.bf16.mxu0 0
    %445 = vmatpush1.bf16.msra.mxu0 0
    %446 = vmatprep.subr.bf16.mxu0 0
    %447 = vmatpush1.bf16.msra.mxu0 0
    %448 = vmatprep.subr.bf16.mxu0 0
    %449 = vmatpush1.bf16.msra.mxu0 0
    %450 = vmatprep.subr.bf16.mxu0 0
    %451 = vmatpush1.bf16.msra.mxu0 0
    %452 = vmatprep.subr.bf16.mxu0 0
    %453 = vmatpush1.bf16.msra.mxu0 0
    %454 = vmatprep.subr.bf16.mxu0 0
    %455 = vmatpush1.bf16.msra.mxu0 0
    %456 = vmatprep.mubr.bf16.mxu0 0
    %457 = vmatmul.mubr.bf16.gmra.mrb[0].mxu0 %v374
    %v458 = vpop.f32.mrb[0].mxu0
    %v459 = vadd.f32 0.0, %v458
    %v460 = vpop.f32.mrb[0].mxu0
    %v461 = vpop.f32.mrb[0].mxu0
    %v462 = vadd.f32 0.0, %v461
    %v463 = vpop.f32.mrb[0].mxu0
    %464 = vdwg.mxu0
    %v481 = vunpack.c.l.b16 %v80
    %v482 = vunpack.c.h.b16 %v80
    %v483 = vunpack.c.l.b16 %v81
    %v484 = vunpack.c.h.b16 %v81
    %v485 = vunpack.c.l.b16 %v82
    %v486 = vunpack.c.h.b16 %v82
    %v487 = vunpack.c.l.b16 %v83
    %v488 = vunpack.c.h.b16 %v83
    %v489 = vunpack.c.l.b16 %v84
    %v490 = vunpack.c.h.b16 %v84
    %v491 = vunpack.c.l.b16 %v85
    %v492 = vunpack.c.h.b16 %v85
    %v493 = vunpack.c.l.b16 %v86
    %v494 = vunpack.c.h.b16 %v86
    %v495 = vunpack.c.l.b16 %v87
    %v496 = vunpack.c.h.b16 %v87
    %v497 = vunpack.c.l.b16 %v88
    %v498 = vunpack.c.h.b16 %v88
    %v499 = vunpack.c.l.b16 %v89
    %v500 = vunpack.c.h.b16 %v89
    %v501 = vunpack.c.l.b16 %v90
    %v502 = vunpack.c.h.b16 %v90
    %v503 = vunpack.c.l.b16 %v91
    %v504 = vunpack.c.h.b16 %v91
    %v505 = vunpack.c.l.b16 %v92
    %v506 = vunpack.c.h.b16 %v92
    %v507 = vunpack.c.l.b16 %v93
    %v508 = vunpack.c.h.b16 %v93
    %v509 = vunpack.c.l.b16 %v94
    %v510 = vunpack.c.h.b16 %v94
    %v511 = vunpack.c.l.b16 %v95
    %v512 = vunpack.c.h.b16 %v95
    %v513 = vpack.c.b16 %v497, %v481
    %v514 = vpack.c.b16 %v498, %v482
    %v515 = vpack.c.b16 %v499, %v483
    %v516 = vpack.c.b16 %v500, %v484
    %v517 = vpack.c.b16 %v501, %v485
    %v518 = vpack.c.b16 %v502, %v486
    %v519 = vpack.c.b16 %v503, %v487
    %v520 = vpack.c.b16 %v504, %v488
    %v521 = vpack.c.b16 %v505, %v489
    %v522 = vpack.c.b16 %v506, %v490
    %v523 = vpack.c.b16 %v507, %v491
    %v524 = vpack.c.b16 %v508, %v492
    %v525 = vpack.c.b16 %v509, %v493
    %v526 = vpack.c.b16 %v510, %v494
    %v527 = vpack.c.b16 %v511, %v495
    %v528 = vpack.c.b16 %v512, %v496
    %v801 = vunpack.c.l.b16 %v96
    %v802 = vunpack.c.l.b16 %v97
    %v803 = vunpack.c.l.b16 %v98
    %v804 = vunpack.c.l.b16 %v99
    %v805 = vunpack.c.l.b16 %v100
    %v806 = vunpack.c.l.b16 %v101
    %v807 = vunpack.c.l.b16 %v102
    %v808 = vunpack.c.l.b16 %v103
    %v809 = vunpack.c.l.b16 %v104
    %v810 = vunpack.c.l.b16 %v105
    %v811 = vunpack.c.l.b16 %v106
    %v812 = vunpack.c.l.b16 %v107
    %v813 = vunpack.c.l.b16 %v108
    %v814 = vunpack.c.l.b16 %v109
    %v815 = vunpack.c.l.b16 %v110
    %v816 = vunpack.c.l.b16 %v111
    %v817 = vunpack.c.l.b16 %v112
    %v818 = vunpack.c.l.b16 %v113
    %v819 = vunpack.c.l.b16 %v114
    %v820 = vunpack.c.l.b16 %v115
    %v821 = vunpack.c.l.b16 %v116
    %v822 = vunpack.c.l.b16 %v117
    %v823 = vunpack.c.l.b16 %v118
    %v824 = vunpack.c.l.b16 %v119
    %v825 = vunpack.c.l.b16 %v120
    %v826 = vunpack.c.l.b16 %v121
    %v827 = vunpack.c.l.b16 %v122
    %v828 = vunpack.c.l.b16 %v123
    %v829 = vunpack.c.l.b16 %v124
    %v830 = vunpack.c.l.b16 %v125
    %v831 = vunpack.c.l.b16 %v126
    %v832 = vunpack.c.l.b16 %v127
    %v833 = vunpack.c.l.b16 %v128
    %v834 = vunpack.c.l.b16 %v129
    %v835 = vunpack.c.l.b16 %v130
    %v836 = vunpack.c.l.b16 %v131
    %v837 = vunpack.c.l.b16 %v132
    %v838 = vunpack.c.l.b16 %v133
    %v839 = vunpack.c.l.b16 %v134
    %v840 = vunpack.c.l.b16 %v135
    %v841 = vunpack.c.l.b16 %v136
    %v842 = vunpack.c.l.b16 %v137
    %v843 = vunpack.c.l.b16 %v138
    %v844 = vunpack.c.l.b16 %v139
    %v845 = vunpack.c.l.b16 %v140
    %v846 = vunpack.c.l.b16 %v141
    %v847 = vunpack.c.l.b16 %v142
    %v848 = vunpack.c.l.b16 %v143
    %v849 = vunpack.c.l.b16 %v144
    %v850 = vunpack.c.l.b16 %v145
    %v851 = vunpack.c.l.b16 %v146
    %v852 = vunpack.c.l.b16 %v147
    %v853 = vunpack.c.l.b16 %v148
    %v854 = vunpack.c.l.b16 %v149
    %v855 = vunpack.c.l.b16 %v150
    %v856 = vunpack.c.l.b16 %v151
    %v857 = vunpack.c.l.b16 %v152
    %v858 = vunpack.c.l.b16 %v153
    %v859 = vunpack.c.l.b16 %v154
    %v860 = vunpack.c.l.b16 %v155
    %v861 = vunpack.c.l.b16 %v156
    %v862 = vunpack.c.l.b16 %v157
    %v863 = vunpack.c.l.b16 %v158
    %v864 = vunpack.c.l.b16 %v159
    %v865 = vunpack.c.l.b16 %v160
    %v866 = vunpack.c.l.b16 %v161
    %v867 = vunpack.c.l.b16 %v162
    %v868 = vunpack.c.l.b16 %v163
    %v869 = vunpack.c.l.b16 %v164
    %v870 = vunpack.c.l.b16 %v165
    %v871 = vunpack.c.l.b16 %v166
    %v872 = vunpack.c.l.b16 %v167
    %v873 = vunpack.c.l.b16 %v168
    %v874 = vunpack.c.l.b16 %v169
    %v875 = vunpack.c.l.b16 %v170
    %v876 = vunpack.c.l.b16 %v171
    %v877 = vunpack.c.l.b16 %v172
    %v878 = vunpack.c.l.b16 %v173
    %v879 = vunpack.c.l.b16 %v174
    %v880 = vunpack.c.l.b16 %v175
    %v881 = vunpack.c.l.b16 %v176
    %v882 = vunpack.c.l.b16 %v177
    %v883 = vunpack.c.l.b16 %v178
    %v884 = vunpack.c.l.b16 %v179
    %v885 = vunpack.c.l.b16 %v180
    %v886 = vunpack.c.l.b16 %v181
    %v887 = vunpack.c.l.b16 %v182
    %v888 = vunpack.c.l.b16 %v183
    %v889 = vunpack.c.l.b16 %v184
    %v890 = vunpack.c.l.b16 %v185
    %v891 = vunpack.c.l.b16 %v186
    %v892 = vunpack.c.l.b16 %v187
    %v893 = vunpack.c.l.b16 %v188
    %v894 = vunpack.c.l.b16 %v189
    %v895 = vunpack.c.l.b16 %v190
    %v896 = vunpack.c.l.b16 %v191
    %v897 = vunpack.c.l.b16 %v192
    %v898 = vunpack.c.l.b16 %v193
    %v899 = vunpack.c.l.b16 %v194
    %v900 = vunpack.c.l.b16 %v195
    %v901 = vunpack.c.l.b16 %v196
    %v902 = vunpack.c.l.b16 %v197
    %v903 = vunpack.c.l.b16 %v198
    %v904 = vunpack.c.l.b16 %v199
    %v905 = vunpack.c.l.b16 %v200
    %v906 = vunpack.c.l.b16 %v201
    %v907 = vunpack.c.l.b16 %v202
    %v908 = vunpack.c.l.b16 %v203
    %v909 = vunpack.c.l.b16 %v204
    %v910 = vunpack.c.l.b16 %v205
    %v911 = vunpack.c.l.b16 %v206
    %v912 = vunpack.c.l.b16 %v207
    %v913 = vunpack.c.l.b16 %v208
    %v914 = vunpack.c.l.b16 %v209
    %v915 = vunpack.c.l.b16 %v210
    %v916 = vunpack.c.l.b16 %v211
    %v917 = vunpack.c.l.b16 %v212
    %v918 = vunpack.c.l.b16 %v213
    %v919 = vunpack.c.l.b16 %v214
    %v920 = vunpack.c.l.b16 %v215
    %v921 = vunpack.c.l.b16 %v216
    %v922 = vunpack.c.l.b16 %v217
    %v923 = vunpack.c.l.b16 %v218
    %v924 = vunpack.c.l.b16 %v219
    %v925 = vunpack.c.l.b16 %v220
    %v926 = vunpack.c.l.b16 %v221
    %v927 = vunpack.c.l.b16 %v222
    %v928 = vunpack.c.l.b16 %v223
    %v929 = vunpack.c.l.b16 %v224
    %v930 = vunpack.c.l.b16 %v225
    %v931 = vunpack.c.l.b16 %v226
    %v932 = vunpack.c.l.b16 %v227
    %v933 = vunpack.c.l.b16 %v228
    %v934 = vunpack.c.l.b16 %v229
    %v935 = vunpack.c.l.b16 %v230
    %v936 = vunpack.c.l.b16 %v231
    %v937 = vunpack.c.l.b16 %v232
    %v938 = vunpack.c.l.b16 %v233
    %v939 = vunpack.c.l.b16 %v234
    %v940 = vunpack.c.l.b16 %v235
    %v941 = vunpack.c.l.b16 %v236
    %v942 = vunpack.c.l.b16 %v237
    %v943 = vunpack.c.l.b16 %v238
    %v944 = vunpack.c.l.b16 %v239
    %v945 = vunpack.c.l.b16 %v240
    %v946 = vunpack.c.l.b16 %v241
    %v947 = vunpack.c.l.b16 %v242
    %v948 = vunpack.c.l.b16 %v243
    %v949 = vunpack.c.l.b16 %v244
    %v950 = vunpack.c.l.b16 %v245
    %v951 = vunpack.c.l.b16 %v246
    %v952 = vunpack.c.l.b16 %v247
    %v953 = vunpack.c.l.b16 %v248
    %v954 = vunpack.c.l.b16 %v249
    %v955 = vunpack.c.l.b16 %v250
    %v956 = vunpack.c.l.b16 %v251
    %v957 = vunpack.c.l.b16 %v252
    %v958 = vunpack.c.l.b16 %v253
    %v959 = vunpack.c.l.b16 %v254
    %v960 = vunpack.c.l.b16 %v255
    %v961 = vunpack.c.l.b16 %v256
    %v962 = vunpack.c.l.b16 %v257
    %v963 = vunpack.c.l.b16 %v258
    %v964 = vunpack.c.l.b16 %v259
    %v965 = vunpack.c.l.b16 %v260
    %v966 = vunpack.c.l.b16 %v261
    %v967 = vunpack.c.l.b16 %v262
    %v968 = vunpack.c.l.b16 %v263
    %v969 = vunpack.c.l.b16 %v264
    %v970 = vunpack.c.l.b16 %v265
    %v971 = vunpack.c.l.b16 %v266
    %v972 = vunpack.c.l.b16 %v267
    %v973 = vunpack.c.l.b16 %v268
    %v974 = vunpack.c.l.b16 %v269
    %v975 = vunpack.c.l.b16 %v270
    %v976 = vunpack.c.l.b16 %v271
    %v977 = vunpack.c.l.b16 %v272
    %v978 = vunpack.c.l.b16 %v273
    %v979 = vunpack.c.l.b16 %v274
    %v980 = vunpack.c.l.b16 %v275
    %v981 = vunpack.c.l.b16 %v276
    %v982 = vunpack.c.l.b16 %v277
    %v983 = vunpack.c.l.b16 %v278
    %v984 = vunpack.c.l.b16 %v279
    %v985 = vunpack.c.l.b16 %v280
    %v986 = vunpack.c.l.b16 %v281
    %v987 = vunpack.c.l.b16 %v282
    %v988 = vunpack.c.l.b16 %v283
    %v989 = vunpack.c.l.b16 %v284
    %v990 = vunpack.c.l.b16 %v285
    %v991 = vunpack.c.l.b16 %v286
    %v992 = vunpack.c.l.b16 %v287
    %v993 = vunpack.c.l.b16 %v288
    %v994 = vunpack.c.l.b16 %v289
    %v995 = vunpack.c.l.b16 %v290
    %v996 = vunpack.c.l.b16 %v291
    %v997 = vunpack.c.l.b16 %v292
    %v998 = vunpack.c.l.b16 %v293
    %v999 = vunpack.c.l.b16 %v294
    %v1000 = vunpack.c.l.b16 %v295
    %v1001 = vunpack.c.l.b16 %v296
    %v1002 = vunpack.c.l.b16 %v297
    %v1003 = vunpack.c.l.b16 %v298
    %v1004 = vunpack.c.l.b16 %v299
    %v1005 = vunpack.c.l.b16 %v300
    %v1006 = vunpack.c.l.b16 %v301
    %v1007 = vunpack.c.l.b16 %v302
    %v1008 = vunpack.c.l.b16 %v303
    %v1009 = vunpack.c.l.b16 %v304
    %v1010 = vunpack.c.l.b16 %v305
    %v1011 = vunpack.c.l.b16 %v306
    %v1012 = vunpack.c.l.b16 %v307
    %v1013 = vunpack.c.l.b16 %v308
    %v1014 = vunpack.c.l.b16 %v309
    %v1015 = vunpack.c.l.b16 %v310
    %v1016 = vunpack.c.l.b16 %v311
    %v1017 = vunpack.c.l.b16 %v312
    %v1018 = vunpack.c.l.b16 %v313
    %v1019 = vunpack.c.l.b16 %v314
    %v1020 = vunpack.c.l.b16 %v315
    %v1021 = vunpack.c.l.b16 %v316
    %v1022 = vunpack.c.l.b16 %v317
    %v1023 = vunpack.c.l.b16 %v318
    %v1024 = vunpack.c.l.b16 %v319
    %v1025 = vunpack.c.l.b16 %v320
    %v1026 = vunpack.c.l.b16 %v321
    %v1027 = vunpack.c.l.b16 %v322
    %v1028 = vunpack.c.l.b16 %v323
    %v1029 = vunpack.c.l.b16 %v324
    %v1030 = vunpack.c.l.b16 %v325
    %v1031 = vunpack.c.l.b16 %v326
    %v1032 = vunpack.c.l.b16 %v327
    %v1033 = vunpack.c.l.b16 %v328
    %v1034 = vunpack.c.l.b16 %v329
    %v1035 = vunpack.c.l.b16 %v330
    %v1036 = vunpack.c.l.b16 %v331
    %v1037 = vunpack.c.l.b16 %v332
    %v1038 = vunpack.c.l.b16 %v333
    %v1039 = vunpack.c.l.b16 %v334
    %v1040 = vunpack.c.l.b16 %v335
    %v1041 = vunpack.c.l.b16 %v336
    %v1042 = vunpack.c.l.b16 %v337
    %v1043 = vunpack.c.l.b16 %v338
    %v1044 = vunpack.c.l.b16 %v339
    %v1045 = vunpack.c.l.b16 %v340
    %v1046 = vunpack.c.l.b16 %v341
    %v1047 = vunpack.c.l.b16 %v342
    %v1048 = vunpack.c.l.b16 %v343
    %v1049 = vunpack.c.l.b16 %v344
    %v1050 = vunpack.c.l.b16 %v345
    %v1051 = vunpack.c.l.b16 %v346
    %v1052 = vunpack.c.l.b16 %v347
    %v1053 = vunpack.c.l.b16 %v348
    %v1054 = vunpack.c.l.b16 %v349
    %v1055 = vunpack.c.l.b16 %v350
    %v1056 = vunpack.c.l.b16 %v351
    %v1057 = vpack.c.b16 %v802, %v801
    %v1058 = vpack.c.b16 %v804, %v803
    %v1059 = vpack.c.b16 %v806, %v805
    %v1060 = vpack.c.b16 %v808, %v807
    %v1061 = vpack.c.b16 %v810, %v809
    %v1062 = vpack.c.b16 %v812, %v811
    %v1063 = vpack.c.b16 %v814, %v813
    %v1064 = vpack.c.b16 %v816, %v815
    %v1065 = vpack.c.b16 %v818, %v817
    %v1066 = vpack.c.b16 %v820, %v819
    %v1067 = vpack.c.b16 %v822, %v821
    %v1068 = vpack.c.b16 %v824, %v823
    %v1069 = vpack.c.b16 %v826, %v825
    %v1070 = vpack.c.b16 %v828, %v827
    %v1071 = vpack.c.b16 %v830, %v829
    %v1072 = vpack.c.b16 %v832, %v831
    %v1073 = vpack.c.b16 %v834, %v833
    %v1074 = vpack.c.b16 %v836, %v835
    %v1075 = vpack.c.b16 %v838, %v837
    %v1076 = vpack.c.b16 %v840, %v839
    %v1077 = vpack.c.b16 %v842, %v841
    %v1078 = vpack.c.b16 %v844, %v843
    %v1079 = vpack.c.b16 %v846, %v845
    %v1080 = vpack.c.b16 %v848, %v847
    %v1081 = vpack.c.b16 %v850, %v849
    %v1082 = vpack.c.b16 %v852, %v851
    %v1083 = vpack.c.b16 %v854, %v853
    %v1084 = vpack.c.b16 %v856, %v855
    %v1085 = vpack.c.b16 %v858, %v857
    %v1086 = vpack.c.b16 %v860, %v859
    %v1087 = vpack.c.b16 %v862, %v861
    %v1088 = vpack.c.b16 %v864, %v863
    %v1089 = vpack.c.b16 %v866, %v865
    %v1090 = vpack.c.b16 %v868, %v867
    %v1091 = vpack.c.b16 %v870, %v869
    %v1092 = vpack.c.b16 %v872, %v871
    %v1093 = vpack.c.b16 %v874, %v873
    %v1094 = vpack.c.b16 %v876, %v875
    %v1095 = vpack.c.b16 %v878, %v877
    %v1096 = vpack.c.b16 %v880, %v879
    %v1097 = vpack.c.b16 %v882, %v881
    %v1098 = vpack.c.b16 %v884, %v883
    %v1099 = vpack.c.b16 %v886, %v885
    %v1100 = vpack.c.b16 %v888, %v887
    %v1101 = vpack.c.b16 %v890, %v889
    %v1102 = vpack.c.b16 %v892, %v891
    %v1103 = vpack.c.b16 %v894, %v893
    %v1104 = vpack.c.b16 %v896, %v895
    %v1105 = vpack.c.b16 %v898, %v897
    %v1106 = vpack.c.b16 %v900, %v899
    %v1107 = vpack.c.b16 %v902, %v901
    %v1108 = vpack.c.b16 %v904, %v903
    %v1109 = vpack.c.b16 %v906, %v905
    %v1110 = vpack.c.b16 %v908, %v907
    %v1111 = vpack.c.b16 %v910, %v909
    %v1112 = vpack.c.b16 %v912, %v911
    %v1113 = vpack.c.b16 %v914, %v913
    %v1114 = vpack.c.b16 %v916, %v915
    %v1115 = vpack.c.b16 %v918, %v917
    %v1116 = vpack.c.b16 %v920, %v919
    %v1117 = vpack.c.b16 %v922, %v921
    %v1118 = vpack.c.b16 %v924, %v923
    %v1119 = vpack.c.b16 %v926, %v925
    %v1120 = vpack.c.b16 %v928, %v927
    %v1121 = vpack.c.b16 %v930, %v929
    %v1122 = vpack.c.b16 %v932, %v931
    %v1123 = vpack.c.b16 %v934, %v933
    %v1124 = vpack.c.b16 %v936, %v935
    %v1125 = vpack.c.b16 %v938, %v937
    %v1126 = vpack.c.b16 %v940, %v939
    %v1127 = vpack.c.b16 %v942, %v941
    %v1128 = vpack.c.b16 %v944, %v943
    %v1129 = vpack.c.b16 %v946, %v945
    %v1130 = vpack.c.b16 %v948, %v947
    %v1131 = vpack.c.b16 %v950, %v949
    %v1132 = vpack.c.b16 %v952, %v951
    %v1133 = vpack.c.b16 %v954, %v953
    %v1134 = vpack.c.b16 %v956, %v955
    %v1135 = vpack.c.b16 %v958, %v957
    %v1136 = vpack.c.b16 %v960, %v959
    %v1137 = vpack.c.b16 %v962, %v961
    %v1138 = vpack.c.b16 %v964, %v963
    %v1139 = vpack.c.b16 %v966, %v965
    %v1140 = vpack.c.b16 %v968, %v967
    %v1141 = vpack.c.b16 %v970, %v969
    %v1142 = vpack.c.b16 %v972, %v971
    %v1143 = vpack.c.b16 %v974, %v973
    %v1144 = vpack.c.b16 %v976, %v975
    %v1145 = vpack.c.b16 %v978, %v977
    %v1146 = vpack.c.b16 %v980, %v979
    %v1147 = vpack.c.b16 %v982, %v981
    %v1148 = vpack.c.b16 %v984, %v983
    %v1149 = vpack.c.b16 %v986, %v985
    %v1150 = vpack.c.b16 %v988, %v987
    %v1151 = vpack.c.b16 %v990, %v989
    %v1152 = vpack.c.b16 %v992, %v991
    %v1153 = vpack.c.b16 %v994, %v993
    %v1154 = vpack.c.b16 %v996, %v995
    %v1155 = vpack.c.b16 %v998, %v997
    %v1156 = vpack.c.b16 %v1000, %v999
    %v1157 = vpack.c.b16 %v1002, %v1001
    %v1158 = vpack.c.b16 %v1004, %v1003
    %v1159 = vpack.c.b16 %v1006, %v1005
    %v1160 = vpack.c.b16 %v1008, %v1007
    %v1161 = vpack.c.b16 %v1010, %v1009
    %v1162 = vpack.c.b16 %v1012, %v1011
    %v1163 = vpack.c.b16 %v1014, %v1013
    %v1164 = vpack.c.b16 %v1016, %v1015
    %v1165 = vpack.c.b16 %v1018, %v1017
    %v1166 = vpack.c.b16 %v1020, %v1019
    %v1167 = vpack.c.b16 %v1022, %v1021
    %v1168 = vpack.c.b16 %v1024, %v1023
    %v1169 = vpack.c.b16 %v1026, %v1025
    %v1170 = vpack.c.b16 %v1028, %v1027
    %v1171 = vpack.c.b16 %v1030, %v1029
    %v1172 = vpack.c.b16 %v1032, %v1031
    %v1173 = vpack.c.b16 %v1034, %v1033
    %v1174 = vpack.c.b16 %v1036, %v1035
    %v1175 = vpack.c.b16 %v1038, %v1037
    %v1176 = vpack.c.b16 %v1040, %v1039
    %v1177 = vpack.c.b16 %v1042, %v1041
    %v1178 = vpack.c.b16 %v1044, %v1043
    %v1179 = vpack.c.b16 %v1046, %v1045
    %v1180 = vpack.c.b16 %v1048, %v1047
    %v1181 = vpack.c.b16 %v1050, %v1049
    %v1182 = vpack.c.b16 %v1052, %v1051
    %v1183 = vpack.c.b16 %v1054, %v1053
    %v1184 = vpack.c.b16 %v1056, %v1055
    %1313 = vmatprep.subr.bf16.mxu0 0
    %1314 = vmatpush1.bf16.msra.mxu0 %v1057
    %1315 = vmatprep.subr.bf16.mxu0 0
    %1316 = vmatpush1.bf16.msra.mxu0 %v1058
    %1317 = vmatprep.subr.bf16.mxu0 0
    %1318 = vmatpush1.bf16.msra.mxu0 %v1059
    %1319 = vmatprep.subr.bf16.mxu0 0
    %1320 = vmatpush1.bf16.msra.mxu0 %v1060
    %1321 = vmatprep.subr.bf16.mxu0 0
    %1322 = vmatpush1.bf16.msra.mxu0 %v1061
    %1323 = vmatprep.subr.bf16.mxu0 0
    %1324 = vmatpush1.bf16.msra.mxu0 %v1062
    %1325 = vmatprep.subr.bf16.mxu0 0
    %1326 = vmatpush1.bf16.msra.mxu0 %v1063
    %1327 = vmatprep.subr.bf16.mxu0 0
    %1328 = vmatpush1.bf16.msra.mxu0 %v1064
    %1329 = vmatprep.subr.bf16.mxu0 0
    %1330 = vmatpush1.bf16.msra.mxu0 %v1065
    %1331 = vmatprep.subr.bf16.mxu0 0
    %1332 = vmatpush1.bf16.msra.mxu0 %v1066
    %1333 = vmatprep.subr.bf16.mxu0 0
    %1334 = vmatpush1.bf16.msra.mxu0 %v1067
    %1335 = vmatprep.subr.bf16.mxu0 0
    %1336 = vmatpush1.bf16.msra.mxu0 %v1068
    %1337 = vmatprep.subr.bf16.mxu0 0
    %1338 = vmatpush1.bf16.msra.mxu0 %v1069
    %1339 = vmatprep.subr.bf16.mxu0 0
    %1340 = vmatpush1.bf16.msra.mxu0 %v1070
    %1341 = vmatprep.subr.bf16.mxu0 0
    %1342 = vmatpush1.bf16.msra.mxu0 %v1071
    %1343 = vmatprep.subr.bf16.mxu0 0
    %1344 = vmatpush1.bf16.msra.mxu0 %v1072
    %1345 = vmatprep.mubr.bf16.mxu0 %v514
    %1346 = vmatmul.mubr.bf16.gmra.mrb[0].mxu0 %v513
    %v1347 = vpop.f32.mrb[0].mxu0
    %v1348 = vadd.f32 %v459, %v1347
    %v1349 = vpop.f32.mrb[0].mxu0
    %v1350 = vpop.f32.mrb[0].mxu0
    %v1351 = vadd.f32 %v462, %v1350
    %v1352 = vpop.f32.mrb[0].mxu0
    %1353 = vdwg.mxu0
    %1354 = vmatprep.subr.bf16.mxu0 0
    %1355 = vmatpush1.bf16.msra.mxu0 %v1073
    %1356 = vmatprep.subr.bf16.mxu0 0
    %1357 = vmatpush1.bf16.msra.mxu0 %v1074
    %1358 = vmatprep.subr.bf16.mxu0 0
    %1359 = vmatpush1.bf16.msra.mxu0 %v1075
    %1360 = vmatprep.subr.bf16.mxu0 0
    %1361 = vmatpush1.bf16.msra.mxu0 %v1076
    %1362 = vmatprep.subr.bf16.mxu0 0
    %1363 = vmatpush1.bf16.msra.mxu0 %v1077
    %1364 = vmatprep.subr.bf16.mxu0 0
    %1365 = vmatpush1.bf16.msra.mxu0 %v1078
    %1366 = vmatprep.subr.bf16.mxu0 0
    %1367 = vmatpush1.bf16.msra.mxu0 %v1079
    %1368 = vmatprep.subr.bf16.mxu0 0
    %1369 = vmatpush1.bf16.msra.mxu0 %v1080
    %1370 = vmatprep.subr.bf16.mxu0 0
    %1371 = vmatpush1.bf16.msra.mxu0 %v1081
    %1372 = vmatprep.subr.bf16.mxu0 0
    %1373 = vmatpush1.bf16.msra.mxu0 %v1082
    %1374 = vmatprep.subr.bf16.mxu0 0
    %1375 = vmatpush1.bf16.msra.mxu0 %v1083
    %1376 = vmatprep.subr.bf16.mxu0 0
    %1377 = vmatpush1.bf16.msra.mxu0 %v1084
    %1378 = vmatprep.subr.bf16.mxu0 0
    %1379 = vmatpush1.bf16.msra.mxu0 %v1085
    %1380 = vmatprep.subr.bf16.mxu0 0
    %1381 = vmatpush1.bf16.msra.mxu0 %v1086
    %1382 = vmatprep.subr.bf16.mxu0 0
    %1383 = vmatpush1.bf16.msra.mxu0 %v1087
    %1384 = vmatprep.subr.bf16.mxu0 0
    %1385 = vmatpush1.bf16.msra.mxu0 %v1088
    %1386 = vmatprep.mubr.bf16.mxu0 %v516
    %1387 = vmatmul.mubr.bf16.gmra.mrb[0].mxu0 %v515
    %v1388 = vpop.f32.mrb[0].mxu0
    %v1389 = vadd.f32 %v1348, %v1388
    %v1390 = vpop.f32.mrb[0].mxu0
    %v1391 = vpop.f32.mrb[0].mxu0
    %v1392 = vadd.f32 %v1351, %v1391
    %v1393 = vpop.f32.mrb[0].mxu0
    %1394 = vdwg.mxu0
    %1395 = vmatprep.subr.bf16.mxu0 0
    %1396 = vmatpush1.bf16.msra.mxu0 %v1089
    %1397 = vmatprep.subr.bf16.mxu0 0
    %1398 = vmatpush1.bf16.msra.mxu0 %v1090
    %1399 = vmatprep.subr.bf16.mxu0 0
    %1400 = vmatpush1.bf16.msra.mxu0 %v1091
    %1401 = vmatprep.subr.bf16.mxu0 0
    %1402 = vmatpush1.bf16.msra.mxu0 %v1092
    %1403 = vmatprep.subr.bf16.mxu0 0
    %1404 = vmatpush1.bf16.msra.mxu0 %v1093
    %1405 = vmatprep.subr.bf16.mxu0 0
    %1406 = vmatpush1.bf16.msra.mxu0 %v1094
    %1407 = vmatprep.subr.bf16.mxu0 0
    %1408 = vmatpush1.bf16.msra.mxu0 %v1095
    %1409 = vmatprep.subr.bf16.mxu0 0
    %1410 = vmatpush1.bf16.msra.mxu0 %v1096
    %1411 = vmatprep.subr.bf16.mxu0 0
    %1412 = vmatpush1.bf16.msra.mxu0 %v1097
    %1413 = vmatprep.subr.bf16.mxu0 0
    %1414 = vmatpush1.bf16.msra.mxu0 %v1098
    %1415 = vmatprep.subr.bf16.mxu0 0
    %1416 = vmatpush1.bf16.msra.mxu0 %v1099
    %1417 = vmatprep.subr.bf16.mxu0 0
    %1418 = vmatpush1.bf16.msra.mxu0 %v1100
    %1419 = vmatprep.subr.bf16.mxu0 0
    %1420 = vmatpush1.bf16.msra.mxu0 %v1101
    %1421 = vmatprep.subr.bf16.mxu0 0
    %1422 = vmatpush1.bf16.msra.mxu0 %v1102
    %1423 = vmatprep.subr.bf16.mxu0 0
    %1424 = vmatpush1.bf16.msra.mxu0 %v1103
    %1425 = vmatprep.subr.bf16.mxu0 0
    %1426 = vmatpush1.bf16.msra.mxu0 %v1104
    %1427 = vmatprep.mubr.bf16.mxu0 %v518
    %1428 = vmatmul.mubr.bf16.gmra.mrb[0].mxu0 %v517
    %v1429 = vpop.f32.mrb[0].mxu0
    %v1430 = vadd.f32 %v1389, %v1429
    %v1431 = vpop.f32.mrb[0].mxu0
    %v1432 = vpop.f32.mrb[0].mxu0
    %v1433 = vadd.f32 %v1392, %v1432
    %v1434 = vpop.f32.mrb[0].mxu0
    %1435 = vdwg.mxu0
    %1436 = vmatprep.subr.bf16.mxu0 0
    %1437 = vmatpush1.bf16.msra.mxu0 %v1105
    %1438 = vmatprep.subr.bf16.mxu0 0
    %1439 = vmatpush1.bf16.msra.mxu0 %v1106
    %1440 = vmatprep.subr.bf16.mxu0 0
    %1441 = vmatpush1.bf16.msra.mxu0 %v1107
    %1442 = vmatprep.subr.bf16.mxu0 0
    %1443 = vmatpush1.bf16.msra.mxu0 %v1108
    %1444 = vmatprep.subr.bf16.mxu0 0
    %1445 = vmatpush1.bf16.msra.mxu0 %v1109
    %1446 = vmatprep.subr.bf16.mxu0 0
    %1447 = vmatpush1.bf16.msra.mxu0 %v1110
    %1448 = vmatprep.subr.bf16.mxu0 0
    %1449 = vmatpush1.bf16.msra.mxu0 %v1111
    %1450 = vmatprep.subr.bf16.mxu0 0
    %1451 = vmatpush1.bf16.msra.mxu0 %v1112
    %1452 = vmatprep.subr.bf16.mxu0 0
    %1453 = vmatpush1.bf16.msra.mxu0 %v1113
    %1454 = vmatprep.subr.bf16.mxu0 0
    %1455 = vmatpush1.bf16.msra.mxu0 %v1114
    %1456 = vmatprep.subr.bf16.mxu0 0
    %1457 = vmatpush1.bf16.msra.mxu0 %v1115
    %1458 = vmatprep.subr.bf16.mxu0 0
    %1459 = vmatpush1.bf16.msra.mxu0 %v1116
    %1460 = vmatprep.subr.bf16.mxu0 0
    %1461 = vmatpush1.bf16.msra.mxu0 %v1117
    %1462 = vmatprep.subr.bf16.mxu0 0
    %1463 = vmatpush1.bf16.msra.mxu0 %v1118
    %1464 = vmatprep.subr.bf16.mxu0 0
    %1465 = vmatpush1.bf16.msra.mxu0 %v1119
    %1466 = vmatprep.subr.bf16.mxu0 0
    %1467 = vmatpush1.bf16.msra.mxu0 %v1120
    %1468 = vmatprep.mubr.bf16.mxu0 %v520
    %1469 = vmatmul.mubr.bf16.gmra.mrb[0].mxu0 %v519
    %v1470 = vpop.f32.mrb[0].mxu0
    %v1471 = vadd.f32 %v1430, %v1470
    %v1472 = vpop.f32.mrb[0].mxu0
    %v1473 = vpop.f32.mrb[0].mxu0
    %v1474 = vadd.f32 %v1433, %v1473
    %v1475 = vpop.f32.mrb[0].mxu0
    %1476 = vdwg.mxu0
    %1477 = vmatprep.subr.bf16.mxu0 0
    %1478 = vmatpush1.bf16.msra.mxu0 %v1121
    %1479 = vmatprep.subr.bf16.mxu0 0
    %1480 = vmatpush1.bf16.msra.mxu0 %v1122
    %1481 = vmatprep.subr.bf16.mxu0 0
    %1482 = vmatpush1.bf16.msra.mxu0 %v1123
    %1483 = vmatprep.subr.bf16.mxu0 0
    %1484 = vmatpush1.bf16.msra.mxu0 %v1124
    %1485 = vmatprep.subr.bf16.mxu0 0
    %1486 = vmatpush1.bf16.msra.mxu0 %v1125
    %1487 = vmatprep.subr.bf16.mxu0 0
    %1488 = vmatpush1.bf16.msra.mxu0 %v1126
    %1489 = vmatprep.subr.bf16.mxu0 0
    %1490 = vmatpush1.bf16.msra.mxu0 %v1127
    %1491 = vmatprep.subr.bf16.mxu0 0
    %1492 = vmatpush1.bf16.msra.mxu0 %v1128
    %1493 = vmatprep.subr.bf16.mxu0 0
    %1494 = vmatpush1.bf16.msra.mxu0 %v1129
    %1495 = vmatprep.subr.bf16.mxu0 0
    %1496 = vmatpush1.bf16.msra.mxu0 %v1130
    %1497 = vmatprep.subr.bf16.mxu0 0
    %1498 = vmatpush1.bf16.msra.mxu0 %v1131
    %1499 = vmatprep.subr.bf16.mxu0 0
    %1500 = vmatpush1.bf16.msra.mxu0 %v1132
    %1501 = vmatprep.subr.bf16.mxu0 0
    %1502 = vmatpush1.bf16.msra.mxu0 %v1133
    %1503 = vmatprep.subr.bf16.mxu0 0
    %1504 = vmatpush1.bf16.msra.mxu0 %v1134
    %1505 = vmatprep.subr.bf16.mxu0 0
    %1506 = vmatpush1.bf16.msra.mxu0 %v1135
    %1507 = vmatprep.subr.bf16.mxu0 0
    %1508 = vmatpush1.bf16.msra.mxu0 %v1136
    %1509 = vmatprep.mubr.bf16.mxu0 %v522
    %1510 = vmatmul.mubr.bf16.gmra.mrb[0].mxu0 %v521
    %v1511 = vpop.f32.mrb[0].mxu0
    %v1512 = vadd.f32 %v1471, %v1511
    %v1513 = vpop.f32.mrb[0].mxu0
    %v1514 = vpop.f32.mrb[0].mxu0
    %v1515 = vadd.f32 %v1474, %v1514
    %v1516 = vpop.f32.mrb[0].mxu0
    %1517 = vdwg.mxu0
    %1518 = vmatprep.subr.bf16.mxu0 0
    %1519 = vmatpush1.bf16.msra.mxu0 %v1137
    %1520 = vmatprep.subr.bf16.mxu0 0
    %1521 = vmatpush1.bf16.msra.mxu0 %v1138
    %1522 = vmatprep.subr.bf16.mxu0 0
    %1523 = vmatpush1.bf16.msra.mxu0 %v1139
    %1524 = vmatprep.subr.bf16.mxu0 0
    %1525 = vmatpush1.bf16.msra.mxu0 %v1140
    %1526 = vmatprep.subr.bf16.mxu0 0
    %1527 = vmatpush1.bf16.msra.mxu0 %v1141
    %1528 = vmatprep.subr.bf16.mxu0 0
    %1529 = vmatpush1.bf16.msra.mxu0 %v1142
    %1530 = vmatprep.subr.bf16.mxu0 0
    %1531 = vmatpush1.bf16.msra.mxu0 %v1143
    %1532 = vmatprep.subr.bf16.mxu0 0
    %1533 = vmatpush1.bf16.msra.mxu0 %v1144
    %1534 = vmatprep.subr.bf16.mxu0 0
    %1535 = vmatpush1.bf16.msra.mxu0 %v1145
    %1536 = vmatprep.subr.bf16.mxu0 0
    %1537 = vmatpush1.bf16.msra.mxu0 %v1146
    %1538 = vmatprep.subr.bf16.mxu0 0
    %1539 = vmatpush1.bf16.msra.mxu0 %v1147
    %1540 = vmatprep.subr.bf16.mxu0 0
    %1541 = vmatpush1.bf16.msra.mxu0 %v1148
    %1542 = vmatprep.subr.bf16.mxu0 0
    %1543 = vmatpush1.bf16.msra.mxu0 %v1149
    %1544 = vmatprep.subr.bf16.mxu0 0
    %1545 = vmatpush1.bf16.msra.mxu0 %v1150
    %1546 = vmatprep.subr.bf16.mxu0 0
    %1547 = vmatpush1.bf16.msra.mxu0 %v1151
    %1548 = vmatprep.subr.bf16.mxu0 0
    %1549 = vmatpush1.bf16.msra.mxu0 %v1152
    %1550 = vmatprep.mubr.bf16.mxu0 %v524
    %1551 = vmatmul.mubr.bf16.gmra.mrb[0].mxu0 %v523
    %v1552 = vpop.f32.mrb[0].mxu0
    %v1553 = vadd.f32 %v1512, %v1552
    %v1554 = vpop.f32.mrb[0].mxu0
    %v1555 = vpop.f32.mrb[0].mxu0
    %v1556 = vadd.f32 %v1515, %v1555
    %v1557 = vpop.f32.mrb[0].mxu0
    %1558 = vdwg.mxu0
    %1559 = vmatprep.subr.bf16.mxu0 0
    %1560 = vmatpush1.bf16.msra.mxu0 %v1153
    %1561 = vmatprep.subr.bf16.mxu0 0
    %1562 = vmatpush1.bf16.msra.mxu0 %v1154
    %1563 = vmatprep.subr.bf16.mxu0 0
    %1564 = vmatpush1.bf16.msra.mxu0 %v1155
    %1565 = vmatprep.subr.bf16.mxu0 0
    %1566 = vmatpush1.bf16.msra.mxu0 %v1156
    %1567 = vmatprep.subr.bf16.mxu0 0
    %1568 = vmatpush1.bf16.msra.mxu0 %v1157
    %1569 = vmatprep.subr.bf16.mxu0 0
    %1570 = vmatpush1.bf16.msra.mxu0 %v1158
    %1571 = vmatprep.subr.bf16.mxu0 0
    %1572 = vmatpush1.bf16.msra.mxu0 %v1159
    %1573 = vmatprep.subr.bf16.mxu0 0
    %1574 = vmatpush1.bf16.msra.mxu0 %v1160
    %1575 = vmatprep.subr.bf16.mxu0 0
    %1576 = vmatpush1.bf16.msra.mxu0 %v1161
    %1577 = vmatprep.subr.bf16.mxu0 0
    %1578 = vmatpush1.bf16.msra.mxu0 %v1162
    %1579 = vmatprep.subr.bf16.mxu0 0
    %1580 = vmatpush1.bf16.msra.mxu0 %v1163
    %1581 = vmatprep.subr.bf16.mxu0 0
    %1582 = vmatpush1.bf16.msra.mxu0 %v1164
    %1583 = vmatprep.subr.bf16.mxu0 0
    %1584 = vmatpush1.bf16.msra.mxu0 %v1165
    %1585 = vmatprep.subr.bf16.mxu0 0
    %1586 = vmatpush1.bf16.msra.mxu0 %v1166
    %1587 = vmatprep.subr.bf16.mxu0 0
    %1588 = vmatpush1.bf16.msra.mxu0 %v1167
    %1589 = vmatprep.subr.bf16.mxu0 0
    %1590 = vmatpush1.bf16.msra.mxu0 %v1168
    %1591 = vmatprep.mubr.bf16.mxu0 %v526
    %1592 = vmatmul.mubr.bf16.gmra.mrb[0].mxu0 %v525
    %v1593 = vpop.f32.mrb[0].mxu0
    %v1594 = vadd.f32 %v1553, %v1593
    %v1595 = vpop.f32.mrb[0].mxu0
    %v1596 = vpop.f32.mrb[0].mxu0
    %v1597 = vadd.f32 %v1556, %v1596
    %v1598 = vpop.f32.mrb[0].mxu0
    %1599 = vdwg.mxu0
    %1600 = vmatprep.subr.bf16.mxu0 0
    %1601 = vmatpush1.bf16.msra.mxu0 %v1169
    %1602 = vmatprep.subr.bf16.mxu0 0
    %1603 = vmatpush1.bf16.msra.mxu0 %v1170
    %1604 = vmatprep.subr.bf16.mxu0 0
    %1605 = vmatpush1.bf16.msra.mxu0 %v1171
    %1606 = vmatprep.subr.bf16.mxu0 0
    %1607 = vmatpush1.bf16.msra.mxu0 %v1172
    %1608 = vmatprep.subr.bf16.mxu0 0
    %1609 = vmatpush1.bf16.msra.mxu0 %v1173
    %1610 = vmatprep.subr.bf16.mxu0 0
    %1611 = vmatpush1.bf16.msra.mxu0 %v1174
    %1612 = vmatprep.subr.bf16.mxu0 0
    %1613 = vmatpush1.bf16.msra.mxu0 %v1175
    %1614 = vmatprep.subr.bf16.mxu0 0
    %1615 = vmatpush1.bf16.msra.mxu0 %v1176
    %1616 = vmatprep.subr.bf16.mxu0 0
    %1617 = vmatpush1.bf16.msra.mxu0 %v1177
    %1618 = vmatprep.subr.bf16.mxu0 0
    %1619 = vmatpush1.bf16.msra.mxu0 %v1178
    %1620 = vmatprep.subr.bf16.mxu0 0
    %1621 = vmatpush1.bf16.msra.mxu0 %v1179
    %1622 = vmatprep.subr.bf16.mxu0 0
    %1623 = vmatpush1.bf16.msra.mxu0 %v1180
    %1624 = vmatprep.subr.bf16.mxu0 0
    %1625 = vmatpush1.bf16.msra.mxu0 %v1181
    %1626 = vmatprep.subr.bf16.mxu0 0
    %1627 = vmatpush1.bf16.msra.mxu0 %v1182
    %1628 = vmatprep.subr.bf16.mxu0 0
    %1629 = vmatpush1.bf16.msra.mxu0 %v1183
    %1630 = vmatprep.subr.bf16.mxu0 0
    %1631 = vmatpush1.bf16.msra.mxu0 %v1184
    %1632 = vmatprep.mubr.bf16.mxu0 %v528
    %1633 = vmatmul.mubr.bf16.gmra.mrb[0].mxu0 %v527
    %v1634 = vpop.f32.mrb[0].mxu0
    %v1635 = vadd.f32 %v1594, %v1634
    %v1636 = vpop.f32.mrb[0].mxu0
    %v1637 = vpop.f32.mrb[0].mxu0
    %v1638 = vadd.f32 %v1597, %v1637
    %v1639 = vpop.f32.mrb[0].mxu0
    %1640 = vdwg.mxu0
    %1641 = vst [vmem:[#allocation10] sm:$0xff] %v1635
    %1642 = vst [vmem:[#allocation10 + $0x8] sm:$0xff] %v1638
    // Predicated region
    $region34: #{tpu_custom_call.1} parent=1 // pred_check
      _
    $region35: #{tpu_custom_call.1} parent=1 // pred_check_branch
      %1644 = sbr.rel (0) target = $region37
    $region36: #{tpu_custom_call.1} parent=1 // pred_region
      %s1646 = ssub.s32 256, 256
      %1647 = vsyncadd [#allocation4], %s1646
      %s1648 = sshll.u32 [#allocation10], 4
      %s1649 = int_to_ptr.vmem [resolvable:$true] %s1648
      %1654 = dma.vmem_to_hbm [thread:$0]  %s1649, 256, %s4, [#allocation4], 128, 128, 8
    $region37: #{tpu_custom_call.1} parent=1 // pred_fallthru
      _
    // Predicated region
    $region38: #{tpu_custom_call.1} parent=1 // pred_check
      _
    $region39: #{tpu_custom_call.1} parent=1 // pred_check_branch
      %1656 = sbr.rel (0) target = $region41
    $region40: #{tpu_custom_call.1} parent=1 // pred_region
      %1657 = dma.done [#allocation4], 256
    $region41: #{tpu_custom_call.1} parent=1 // pred_fallthru
      _
    %1658 = vsyncpa [#allocation3], 1
    %1659 = vsyncpa [#allocation6], 1
    %1660 = vsyncpa [#allocation9], 1
    %1661 = vsyncpa [#allocation4], 1

</llo_original>
